<compile_context>
chip_gen: v7x
topology: tpu7x:2x2x1
jax: 0.10.0
libtpu: 0.0.40
codegen_flags: <defaults>
</compile_context>

<pallas_src>
import functools
import inspect
import math

import jax
import jax.numpy as jnp
from jax.experimental import pallas as pl
from jax.experimental.pallas import tpu as pltpu

try:
    _HAS_PIPELINE_MODE = (hasattr(pl, "Buffered")
                          and "pipeline_mode" in inspect.signature(pl.BlockSpec).parameters)
except (TypeError, ValueError):
    _HAS_PIPELINE_MODE = False


def _const_spec(shape):
    """BlockSpec for a grid-constant (never re-indexed) operand, single-buffered."""
    zeros = (0,) * len(shape)
    if _HAS_PIPELINE_MODE:
        return pl.BlockSpec(shape, lambda b, q: zeros, pipeline_mode=pl.Buffered(1))
    return pl.BlockSpec(shape, lambda b, q: zeros)


def _rotate_half(z, half):
    """[z1, z2] -> [z2, z1] along the last axis (size 2*half)."""
    if (2 * half) % 128 == 0:
        return pltpu.roll(z, shift=half, axis=1)   # XLU lane rotate, no copy
    return jnp.roll(z, shift=half, axis=1)         # small head_dim fallback (slice+concat)


def _encoder_layer_kernel(x_ref, maskb_ref, cos_ref, sin_ref, wn_ref,
                          wkvq_ref, bkvq_ref, wo_ref, bo_ref,
                          w1_ref, b1_ref, w2_ref, b2_ref,
                          out_x_ref, out_attn_ref, ctx_ref, *kv_scratch,
                          n_heads, sq, n_q_tiles, eps):
    f32, bf16 = jnp.float32, jnp.bfloat16
    S, D = x_ref.shape[-2], x_ref.shape[-1]
    hd = D // n_heads
    half = hd // 2
    inv_scale = jnp.float32(1.0 / math.sqrt(hd))

    wn = wn_ref[...]        # (1, D)   shared RMSNorm weight (module reuses it for both norms)
    bias = maskb_ref[0]     # (1, S)   additive key mask: -1e10 on masked key positions
    cos_k = cos_ref[...]    # (S, hd)  = [cos, cos]
    sin_k = sin_ref[...]    # (S, hd)  = [-sin, sin]  (rotate-half sign baked in)

    def rms(y):
        return y * jax.lax.rsqrt(jnp.mean(y * y, axis=-1, keepdims=True) + eps) * wn

    def rope(z, cos, sin):
        return z * cos + _rotate_half(z, half) * sin

    row0 = pl.multiple_of(pl.program_id(1) * sq, sq)   # first query row of this tile
    x_t = x_ref[0, pl.ds(row0, sq), :]                 # (sq, D) query-tile rows
    xn_t = rms(x_t)

    if n_q_tiles == 1:
        # Fully fused KVQ: one wide (D, 3D) MXU matmul.
        kvq = jnp.dot(xn_t.astype(bf16), wkvq_ref[...],
                      preferred_element_type=f32) + bkvq_ref[...]
        k = kvq[:, :D]
        v = kvq[:, D:2 * D]
        q = kvq[:, 2 * D:] * inv_scale                 # fold 1/sqrt(hd) into q once
        cos_q, sin_q = cos_k, sin_k
        krot_ref = vc_ref = None
    else:
        krot_ref, vc_ref = kv_scratch

        # K/V (+ K RoPE) computed ONCE per batch element, reused by every query tile.
        @pl.when(pl.program_id(1) == 0)
        def _():
            xn_f = rms(x_ref[0])                                      # (S, D)
            kv = jnp.dot(xn_f.astype(bf16), wkvq_ref[:, :2 * D],      # lane-aligned slice
                         preferred_element_type=f32) + bkvq_ref[:, :2 * D]
            vc_ref[...] = kv[:, D:].astype(bf16)
            kf = kv[:, :D]
            for h in range(n_heads):                                  # static unrolled
                sl = slice(h * hd, (h + 1) * hd)
                krot_ref[:, sl] = rope(kf[:, sl], cos_k, sin_k).astype(bf16)

        q = (jnp.dot(xn_t.astype(bf16), wkvq_ref[:, 2 * D:],
                     preferred_element_type=f32) + bkvq_ref[:, 2 * D:]) * inv_scale
        cos_q = cos_ref[pl.ds(row0, sq), :]
        sin_q = sin_ref[pl.ds(row0, sq), :]

    # ---------------- per-head RoPE(q) + attention ----------------
    # TODO(synk): when head_dim < 128, group heads so contraction/output width >= 256
    #             and lane slices stay tile-aligned (v6e/v7x 2x256 MXU).
    for h in range(n_heads):                           # static unrolled loop over heads
        sl = slice(h * hd, (h + 1) * hd)
        qr = rope(q[:, sl], cos_q, sin_q).astype(bf16)               # (sq, hd)
        if n_q_tiles == 1:
            kr = rope(k[:, sl], cos_k, sin_k).astype(bf16)           # (S, hd)
            vh = v[:, sl].astype(bf16)
        else:
            kr = krot_ref[:, sl]                                     # cached, bf16
            vh = vc_ref[:, sl]

        s = jax.lax.dot_general(qr, kr, (((1,), (1,)), ((), ())),
                                preferred_element_type=f32) + bias   # (sq, S)
        m = jnp.max(s, axis=-1, keepdims=True)
        e = jnp.exp(s - m)
        p = e * pl.reciprocal(jnp.sum(e, axis=-1, keepdims=True), approx=True)

        out_attn_ref[0, h, :, :] = p.astype(out_attn_ref.dtype)      # bf16 store
        ctx_ref[:, sl] = jnp.dot(p.astype(bf16), vh,
                                 preferred_element_type=f32).astype(bf16)

    # ---------------- output projection + residual ----------------
    o = jnp.dot(ctx_ref[...], wo_ref[...], preferred_element_type=f32) + bo_ref[...]
    x1 = x_t + o                                      # dropout = identity in eval mode

    # ---------------- RMSNorm + FeedForward + residual ----------------
    xn2 = rms(x1)
    h1 = jnp.maximum(jnp.dot(xn2.astype(bf16), w1_ref[...],
                             preferred_element_type=f32) + b1_ref[...], 0.0)
    ff = jnp.dot(h1.astype(bf16), w2_ref[...],
                 preferred_element_type=f32) + b2_ref[...]
    out_x_ref[0] = x1 + ff


def _vmem_capacity_bytes():
    try:
        return int(getattr(pltpu.get_tpu_info(), "vmem_capacity_bytes", 128 << 20))
    except Exception:
        return 128 << 20


def _vmem_limit_bytes(S, sq, D, d_ff, n_heads, hd, n_q_tiles):
    """Scoped-VMEM sizing: single-buffered bf16 weights + pipelined blocks + scratch + live."""
    weights = 2 * (3 * D * D + D * D + 2 * D * d_ff)                 # bf16, Buffered(1)
    consts = 4 * (3 * D + 2 * D + d_ff + 2 * S * hd + S)             # biases, tables, mask
    blocks = 2 * 4 * (S * D + sq * D) + 2 * 2 * (n_heads * sq * S)   # x/out_x f32, out_attn bf16
    scratch = 2 * sq * D + (4 * S * D if n_q_tiles > 1 else 0)       # ctx + cached K/V (bf16)
    live = 4 * (3 * S * D + 3 * sq * S + sq * d_ff + 3 * sq * D)
    est = weights + consts + blocks + scratch + live + (8 << 20)
    ceiling = (_vmem_capacity_bytes() * 3) // 4       # headroom; 48 MiB on v7x, 96 MiB v5e/v6e
    return int(min(max(est, 32 << 20), ceiling))


def encoder_layer(x, key_pad_mask, params, n_heads, *, eps=1e-6, sq_tile=None):
    """x: (B, S, D) f32.  key_pad_mask: (B, S) bool, True => masked key position."""
    B, S, D = x.shape
    d_ff = params["w1"].shape[1]
    hd = D // n_heads
    half = hd // 2
    sq = S if sq_tile is None else int(sq_tile)
    assert sq == S or (S % sq == 0 and sq % 16 == 0), "bad query tile size"
    n_q_tiles = S // sq

    # rotary tables at full head_dim width, rotate-half sign baked into sin
    inv_freq = 1.0 / (10000.0 ** (jnp.arange(half, dtype=jnp.float32) / half))
    freqs = jnp.arange(S, dtype=jnp.float32)[:, None] * inv_freq[None, :]
    cos, sin = jnp.cos(freqs), jnp.sin(freqs)
    cos_full = jnp.concatenate([cos, cos], axis=-1)              # (S, hd)
    sin_full = jnp.concatenate([-sin, sin], axis=-1)             # (S, hd)

    # additive key-padding bias (B, 1, S): no (B, S, S) mask materialization
    mask_bias = jnp.where(key_pad_mask, -1e10, 0.0).astype(jnp.float32)[:, None, :]

    bf16 = jnp.bfloat16
    # fused weight ordered [K | V | Q] so both in-kernel column slices start lane-aligned
    w_kvq = jnp.concatenate([params["wk"], params["wv"], params["wq"]], axis=1).astype(bf16)
    b_kvq = jnp.concatenate([params["bk"], params["bv"], params["bq"]], axis=1).astype(jnp.float32)
    wo, w1, w2 = (params[k].astype(bf16) for k in ("wo", "w1", "w2"))

    kernel = functools.partial(_encoder_layer_kernel, n_heads=n_heads, sq=sq,
                               n_q_tiles=n_q_tiles, eps=eps)

    # x kept as a full (1, S, D) block with a q-constant index map: the full sequence is
    # needed once per batch element for the cached K/V projection, and Pallas only re-DMAs
    # the block when its index (b) changes, so per-q-tile HBM traffic for x is zero.
    scratch = [pltpu.VMEM((sq, D), jnp.bfloat16)]                  # per-head context slab
    if n_q_tiles > 1:
        scratch += [pltpu.VMEM((S, D), jnp.bfloat16),              # cached RoPE'd K
                    pltpu.VMEM((S, D), jnp.bfloat16)]              # cached V

    flops = (2 * B * S * D * (3 * D)            # KVQ projection
             + 4 * B * n_heads * S * S * hd     # QK^T + PV
             + 2 * B * S * D * D                # output projection
             + 4 * B * S * D * d_ff)            # FFN
    transcendentals = B * n_heads * S * S
    bytes_accessed = (4 * B * S * D * 2 + 2 * B * n_heads * S * S
                      + 2 * (4 * D * D + 2 * D * d_ff)
                      + 4 * (B * S + 2 * S * hd + 6 * D + d_ff))

    out_x, out_attn = pl.pallas_call(
        kernel,
        out_shape=(jax.ShapeDtypeStruct((B, S, D), jnp.float32),
                   jax.ShapeDtypeStruct((B, n_heads, S, S), jnp.bfloat16)),
        grid_spec=pltpu.PrefetchScalarGridSpec(
            num_scalar_prefetch=0,
            grid=(B, n_q_tiles),
            in_specs=[
                pl.BlockSpec((1, S, D), lambda b, q: (b, 0, 0)),   # x (q rows sliced in-kernel)
                pl.BlockSpec((1, 1, S), lambda b, q: (b, 0, 0)),   # additive key-mask bias
                _const_spec((S, hd)), _const_spec((S, hd)),        # cos_full, sin_full (signed)
                _const_spec((1, D)),                               # shared RMSNorm weight
                _const_spec((D, 3 * D)), _const_spec((1, 3 * D)),  # fused W_kvq (bf16), b_kvq
                _const_spec((D, D)), _const_spec((1, D)),          # Wo (bf16), bo
                _const_spec((D, d_ff)), _const_spec((1, d_ff)),    # W1 (bf16), b1
                _const_spec((d_ff, D)), _const_spec((1, D)),       # W2 (bf16), b2
            ],
            out_specs=[
                pl.BlockSpec((1, sq, D), lambda b, q: (b, q, 0)),
                pl.BlockSpec((1, n_heads, sq, S), lambda b, q: (b, 0, q, 0)),
            ],
            scratch_shapes=scratch,
        ),
        compiler_params=pltpu.CompilerParams(
            # q axis must be "arbitrary": q tiles of one batch element reuse the cached K/V
            dimension_semantics=("parallel", "arbitrary"),
            vmem_limit_bytes=_vmem_limit_bytes(S, sq, D, d_ff, n_heads, hd, n_q_tiles)),
        cost_estimate=pl.CostEstimate(flops=int(flops),
                                      transcendentals=int(transcendentals),
                                      bytes_accessed=int(bytes_accessed)),
    )(x, mask_bias, cos_full, sin_full, params["w_norm"],
      w_kvq, b_kvq, wo, params["bo"], w1, params["b1"], w2, params["b2"])
    return out_x, out_attn


def reference(x, key_pad_mask, params, n_heads, eps=1e-6):
    """Pure-JAX f32 replica of the PyTorch forward, for correctness checking."""
    B, S, D = x.shape
    hd = D // n_heads
    half = hd // 2
    wn = params["w_norm"][0]

    def rms(y):
        return y * jax.lax.rsqrt(jnp.mean(y * y, -1, keepdims=True) + eps) * wn

    xn = rms(x)
    q = xn @ params["wq"] + params["bq"][0]
    k = xn @ params["wk"] + params["bk"][0]
    v = xn @ params["wv"] + params["bv"][0]

    def split(z):
        return z.reshape(B, S, n_heads, hd).transpose(0, 2, 1, 3)

    q, k, v = split(q), split(k), split(v)

    inv_freq = 1.0 / (10000.0 ** (jnp.arange(half, dtype=jnp.float32) / half))
    freqs = jnp.arange(S, dtype=jnp.float32)[:, None] * inv_freq[None, :]
    cos, sin = jnp.cos(freqs), jnp.sin(freqs)

    def rope(z):
        z1, z2 = z[..., :half], z[..., half:]
        return jnp.concatenate([z1 * cos - z2 * sin, z1 * sin + z2 * cos], -1)

    q, k = rope(q), rope(k)
    s = q @ k.transpose(0, 1, 3, 2) / jnp.sqrt(jnp.float32(hd))
    s = jnp.where(key_pad_mask[:, None, None, :], -1e10, s)
    p = jax.nn.softmax(s, -1)
    a = (p @ v).transpose(0, 2, 1, 3).reshape(B, S, D)
    o = a @ params["wo"] + params["bo"][0]
    x1 = x + o
    xn2 = rms(x1)
    ff = jnp.maximum(xn2 @ params["w1"] + params["b1"][0], 0.0) @ params["w2"] + params["b2"][0]
    return x1 + ff, p


if __name__ == "__main__":
    B, S, D, H, D_FF = 2, 32, 64, 4, 128

    key = jax.random.PRNGKey(0)
    ks = jax.random.split(key, 13)

    def w(k, shape, scale):
        return jax.random.normal(k, shape, jnp.float32) * scale

    params = {
        "w_norm": 1.0 + 0.1 * jax.random.normal(ks[12], (1, D), jnp.float32),
        "wq": w(ks[0], (D, D), 1.0 / math.sqrt(D)), "bq": w(ks[1], (1, D), 0.02),
        "wk": w(ks[2], (D, D), 1.0 / math.sqrt(D)), "bk": w(ks[3], (1, D), 0.02),
        "wv": w(ks[4], (D, D), 1.0 / math.sqrt(D)), "bv": w(ks[5], (1, D), 0.02),
        "wo": w(ks[6], (D, D), 1.0 / math.sqrt(D)), "bo": w(ks[7], (1, D), 0.02),
        "w1": w(ks[8], (D, D_FF), 1.0 / math.sqrt(D)), "b1": w(ks[9], (1, D_FF), 0.02),
        "w2": w(ks[10], (D_FF, D), 1.0 / math.sqrt(D_FF)), "b2": w(ks[11], (1, D), 0.02),
    }

    x = jax.random.normal(jax.random.PRNGKey(1), (B, S, D), jnp.float32)
    # key-padding mask: last 5 key positions of batch element 1 are masked
    key_pad_mask = jnp.zeros((B, S), dtype=bool).at[1, -5:].set(True)

    ref_x, ref_attn = reference(x, key_pad_mask, params, n_heads=H)

    # exercise both the fully-fused (single query tile) and query-tiled (cached K/V) paths
    for sq_tile in (None, 16):
        out_x, out_attn = encoder_layer(x, key_pad_mask, params, n_heads=H, sq_tile=sq_tile)
        out_x = jax.block_until_ready(out_x)
        out_attn = jax.block_until_ready(out_attn)
        # bf16 matmul inputs / bf16 attention output with f32 accumulation
        assert jnp.allclose(out_x, ref_x, atol=8e-2, rtol=8e-2), \
            f"output mismatch (sq_tile={sq_tile})"
        assert jnp.allclose(out_attn.astype(jnp.float32), ref_attn, atol=4e-2, rtol=4e-2), \
            f"attention mismatch (sq_tile={sq_tile})"

    print("KERNEL_OK")
</pallas_src>

<mosaic_0001>
module attributes {stable_mosaic.version = 11 : i64} {
  func.func @_encoder_layer_kernel(%arg0: i32, %arg1: i32, %arg2: memref<1x32x64xf32, #tpu.memory_space<vmem>>, %arg3: memref<1x1x32xf32, #tpu.memory_space<vmem>>, %arg4: memref<32x16xf32, #tpu.memory_space<vmem>>, %arg5: memref<32x16xf32, #tpu.memory_space<vmem>>, %arg6: memref<1x64xf32, #tpu.memory_space<vmem>>, %arg7: memref<64x192xbf16, #tpu.memory_space<vmem>>, %arg8: memref<1x192xf32, #tpu.memory_space<vmem>>, %arg9: memref<64x64xbf16, #tpu.memory_space<vmem>>, %arg10: memref<1x64xf32, #tpu.memory_space<vmem>>, %arg11: memref<64x128xbf16, #tpu.memory_space<vmem>>, %arg12: memref<1x128xf32, #tpu.memory_space<vmem>>, %arg13: memref<128x64xbf16, #tpu.memory_space<vmem>>, %arg14: memref<1x64xf32, #tpu.memory_space<vmem>>, %arg15: memref<1x32x64xf32, #tpu.memory_space<vmem>>, %arg16: memref<1x4x32x32xbf16, #tpu.memory_space<vmem>>, %arg17: memref<32x64xbf16, #tpu.memory_space<vmem>>) attributes {dimension_semantics = [#tpu.dimension_semantics<parallel>, #tpu.dimension_semantics<arbitrary>], iteration_bounds = array<i64: 2, 1>, scalar_prefetch = 0 : i64, scratch_operands = 1 : i64, tpu.core_type = #tpu.core_type<tc>, window_params = [{transform_indices = @transform_0, window_bounds = array<i64: 1, 32, 64>}, {transform_indices = @transform_1, window_bounds = array<i64: 1, 1, 32>}, {pipeline_mode = #tpu.pipeline_mode<synchronous>, transform_indices = @transform_2, window_bounds = array<i64: 32, 16>}, {pipeline_mode = #tpu.pipeline_mode<synchronous>, transform_indices = @transform_3, window_bounds = array<i64: 32, 16>}, {pipeline_mode = #tpu.pipeline_mode<synchronous>, transform_indices = @transform_4, window_bounds = array<i64: 1, 64>}, {pipeline_mode = #tpu.pipeline_mode<synchronous>, transform_indices = @transform_5, window_bounds = array<i64: 64, 192>}, {pipeline_mode = #tpu.pipeline_mode<synchronous>, transform_indices = @transform_6, window_bounds = array<i64: 1, 192>}, {pipeline_mode = #tpu.pipeline_mode<synchronous>, transform_indices = @transform_7, window_bounds = array<i64: 64, 64>}, {pipeline_mode = #tpu.pipeline_mode<synchronous>, transform_indices = @transform_8, window_bounds = array<i64: 1, 64>}, {pipeline_mode = #tpu.pipeline_mode<synchronous>, transform_indices = @transform_9, window_bounds = array<i64: 64, 128>}, {pipeline_mode = #tpu.pipeline_mode<synchronous>, transform_indices = @transform_10, window_bounds = array<i64: 1, 128>}, {pipeline_mode = #tpu.pipeline_mode<synchronous>, transform_indices = @transform_11, window_bounds = array<i64: 128, 64>}, {pipeline_mode = #tpu.pipeline_mode<synchronous>, transform_indices = @transform_12, window_bounds = array<i64: 1, 64>}, {transform_indices = @transform_13, window_bounds = array<i64: 1, 32, 64>}, {transform_indices = @transform_14, window_bounds = array<i64: 1, 4, 32, 32>}]} {
    %c0 = arith.constant 0 : index
    %c0_0 = arith.constant 0 : index
    %0 = vector.load %arg6[%c0, %c0_0] : memref<1x64xf32, #tpu.memory_space<vmem>>, vector<1x64xf32>
    %c0_1 = arith.constant 0 : index
    %c0_2 = arith.constant 0 : index
    %c0_3 = arith.constant 0 : index
    %1 = vector.load %arg3[%c0_1, %c0_2, %c0_3] : memref<1x1x32xf32, #tpu.memory_space<vmem>>, vector<1x1x32xf32>
    %2 = vector.shape_cast %1 : vector<1x1x32xf32> to vector<1x32xf32>
    %c0_4 = arith.constant 0 : index
    %c0_5 = arith.constant 0 : index
    %3 = vector.load %arg4[%c0_4, %c0_5] : memref<32x16xf32, #tpu.memory_space<vmem>>, vector<32x16xf32>
    %c0_6 = arith.constant 0 : index
    %c0_7 = arith.constant 0 : index
    %4 = vector.load %arg5[%c0_6, %c0_7] : memref<32x16xf32, #tpu.memory_space<vmem>>, vector<32x16xf32>
    %c32_i32 = arith.constant 32 : i32
    %5 = arith.muli %arg1, %c32_i32 : i32
    %6 = tpu.assume_multiple %5, 32 : i32
    %c0_8 = arith.constant 0 : index
    %7 = arith.index_cast %6 : i32 to index
    %c0_9 = arith.constant 0 : index
    %8 = vector.load %arg2[%c0_8, %7, %c0_9] : memref<1x32x64xf32, #tpu.memory_space<vmem>>, vector<1x32x64xf32>
    %9 = vector.shape_cast %8 : vector<1x32x64xf32> to vector<32x64xf32>
    %10 = arith.mulf %9, %9 : vector<32x64xf32>
    %cst = arith.constant dense<0.000000e+00> : vector<32xf32>
    %11 = vector.multi_reduction <add>, %10, %cst [1] : vector<32x64xf32> to vector<32xf32>
    %12 = vector.shape_cast %11 : vector<32xf32> to vector<32x1xf32>
    %cst_10 = arith.constant 6.400000e+01 : f32
    %13 = vector.broadcast %cst_10 : f32 to vector<32x1xf32>
    %14 = arith.divf %12, %13 : vector<32x1xf32>
    %cst_11 = arith.constant 9.99999997E-7 : f32
    %15 = vector.broadcast %cst_11 : f32 to vector<32x1xf32>
    %16 = arith.addf %14, %15 : vector<32x1xf32>
    %17 = math.rsqrt %16 : vector<32x1xf32>
    %18 = vector.broadcast %17 : vector<32x1xf32> to vector<32x64xf32>
    %19 = arith.mulf %9, %18 : vector<32x64xf32>
    %20 = vector.broadcast %0 : vector<1x64xf32> to vector<32x64xf32>
    %21 = arith.mulf %19, %20 : vector<32x64xf32>
    %22 = arith.truncf %21 : vector<32x64xf32> to vector<32x64xbf16>
    %c0_12 = arith.constant 0 : index
    %c0_13 = arith.constant 0 : index
    %23 = vector.load %arg7[%c0_12, %c0_13] : memref<64x192xbf16, #tpu.memory_space<vmem>>, vector<64x192xbf16>
    %cst_14 = arith.constant dense<0.000000e+00> : vector<32x192xf32>
    %24 = tpu.matmul %22, %23, %cst_14 {dimension_numbers = #tpu.dot_dimension_numbers<[1], [0], [0], [1], [0, 0, 1, 1], [], []>} : vector<32x64xbf16>, vector<64x192xbf16>, vector<32x192xf32> -> vector<32x192xf32>
    %c0_15 = arith.constant 0 : index
    %c0_16 = arith.constant 0 : index
    %25 = vector.load %arg8[%c0_15, %c0_16] : memref<1x192xf32, #tpu.memory_space<vmem>>, vector<1x192xf32>
    %26 = vector.broadcast %25 : vector<1x192xf32> to vector<32x192xf32>
    %27 = arith.addf %24, %26 : vector<32x192xf32>
    %28 = vector.extract_strided_slice %27 {offsets = [0, 0], sizes = [32, 64], strides = [1, 1]} : vector<32x192xf32> to vector<32x64xf32>
    %29 = vector.extract_strided_slice %27 {offsets = [0, 64], sizes = [32, 64], strides = [1, 1]} : vector<32x192xf32> to vector<32x64xf32>
    %30 = vector.extract_strided_slice %27 {offsets = [0, 128], sizes = [32, 64], strides = [1, 1]} : vector<32x192xf32> to vector<32x64xf32>
    %cst_17 = arith.constant 2.500000e-01 : f32
    %31 = vector.broadcast %cst_17 : f32 to vector<32x64xf32>
    %32 = arith.mulf %30, %31 : vector<32x64xf32>
    %33 = vector.extract_strided_slice %32 {offsets = [0, 0], sizes = [32, 16], strides = [1, 1]} : vector<32x64xf32> to vector<32x16xf32>
    %34 = arith.mulf %33, %3 : vector<32x16xf32>
    %35 = vector.extract_strided_slice %33 {offsets = [0, 8], sizes = [32, 8], strides = [1, 1]} : vector<32x16xf32> to vector<32x8xf32>
    %36 = vector.extract_strided_slice %33 {offsets = [0, 0], sizes = [32, 8], strides = [1, 1]} : vector<32x16xf32> to vector<32x8xf32>
    %37 = tpu.concatenate %35, %36 in 1 : vector<32x8xf32>, vector<32x8xf32> -> vector<32x16xf32>
    %38 = arith.mulf %37, %4 : vector<32x16xf32>
    %39 = arith.addf %34, %38 : vector<32x16xf32>
    %40 = arith.truncf %39 : vector<32x16xf32> to vector<32x16xbf16>
    %41 = vector.extract_strided_slice %28 {offsets = [0, 0], sizes = [32, 16], strides = [1, 1]} : vector<32x64xf32> to vector<32x16xf32>
    %42 = arith.mulf %41, %3 : vector<32x16xf32>
    %43 = vector.extract_strided_slice %41 {offsets = [0, 8], sizes = [32, 8], strides = [1, 1]} : vector<32x16xf32> to vector<32x8xf32>
    %44 = vector.extract_strided_slice %41 {offsets = [0, 0], sizes = [32, 8], strides = [1, 1]} : vector<32x16xf32> to vector<32x8xf32>
    %45 = tpu.concatenate %43, %44 in 1 : vector<32x8xf32>, vector<32x8xf32> -> vector<32x16xf32>
    %46 = arith.mulf %45, %4 : vector<32x16xf32>
    %47 = arith.addf %42, %46 : vector<32x16xf32>
    %48 = arith.truncf %47 : vector<32x16xf32> to vector<32x16xbf16>
    %49 = vector.extract_strided_slice %29 {offsets = [0, 0], sizes = [32, 16], strides = [1, 1]} : vector<32x64xf32> to vector<32x16xf32>
    %50 = arith.truncf %49 : vector<32x16xf32> to vector<32x16xbf16>
    %cst_18 = arith.constant dense<0.000000e+00> : vector<32x32xf32>
    %51 = tpu.matmul %40, %48, %cst_18 {dimension_numbers = #tpu.dot_dimension_numbers<[1], [1], [0], [0], [0, 0, 1, 0], [], []>} : vector<32x16xbf16>, vector<32x16xbf16>, vector<32x32xf32> -> vector<32x32xf32>
    %52 = vector.broadcast %2 : vector<1x32xf32> to vector<32x32xf32>
    %53 = arith.addf %51, %52 : vector<32x32xf32>
    %cst_19 = arith.constant dense<0xFF800000> : vector<32xf32>
    %54 = vector.multi_reduction <maximumf>, %53, %cst_19 [1] : vector<32x32xf32> to vector<32xf32>
    %55 = vector.shape_cast %54 : vector<32xf32> to vector<32x1xf32>
    %56 = vector.broadcast %55 : vector<32x1xf32> to vector<32x32xf32>
    %57 = arith.subf %53, %56 : vector<32x32xf32>
    %58 = math.exp %57 : vector<32x32xf32>
    %cst_20 = arith.constant dense<0.000000e+00> : vector<32xf32>
    %59 = vector.multi_reduction <add>, %58, %cst_20 [1] : vector<32x32xf32> to vector<32xf32>
    %60 = vector.shape_cast %59 : vector<32xf32> to vector<32x1xf32>
    %61 = tpu.reciprocal %60 {approx = true} : vector<32x1xf32> -> vector<32x1xf32>
    %62 = vector.broadcast %61 : vector<32x1xf32> to vector<32x32xf32>
    %63 = arith.mulf %58, %62 : vector<32x32xf32>
    %64 = arith.truncf %63 : vector<32x32xf32> to vector<32x32xbf16>
    %c0_21 = arith.constant 0 : index
    %c0_22 = arith.constant 0 : index
    %c0_23 = arith.constant 0 : index
    %c0_24 = arith.constant 0 : index
    %65 = vector.load %arg16[%c0_21, %c0_22, %c0_23, %c0_24] : memref<1x4x32x32xbf16, #tpu.memory_space<vmem>>, vector<1x1x32x32xbf16>
    %66 = vector.shape_cast %65 : vector<1x1x32x32xbf16> to vector<32x32xbf16>
    %67 = vector.shape_cast %64 : vector<32x32xbf16> to vector<1x1x32x32xbf16>
    tpu.vector_store %arg16[%c0_21, %c0_22, %c0_23, %c0_24], %67 {strides = array<i32>} : memref<1x4x32x32xbf16, #tpu.memory_space<vmem>>, vector<1x1x32x32xbf16>,
    %68 = arith.truncf %63 : vector<32x32xf32> to vector<32x32xbf16>
    %cst_25 = arith.constant dense<0.000000e+00> : vector<32x16xf32>
    %69 = tpu.matmul %68, %50, %cst_25 {dimension_numbers = #tpu.dot_dimension_numbers<[1], [0], [0], [1], [0, 0, 1, 1], [], []>} : vector<32x32xbf16>, vector<32x16xbf16>, vector<32x16xf32> -> vector<32x16xf32>
    %70 = arith.truncf %69 : vector<32x16xf32> to vector<32x16xbf16>
    %c0_26 = arith.constant 0 : index
    %c0_27 = arith.constant 0 : index
    %71 = vector.load %arg17[%c0_26, %c0_27] : memref<32x64xbf16, #tpu.memory_space<vmem>>, vector<32x16xbf16>
    tpu.vector_store %arg17[%c0_26, %c0_27], %70 {strides = array<i32>} : memref<32x64xbf16, #tpu.memory_space<vmem>>, vector<32x16xbf16>,
    %72 = vector.extract_strided_slice %32 {offsets = [0, 16], sizes = [32, 16], strides = [1, 1]} : vector<32x64xf32> to vector<32x16xf32>
    %73 = arith.mulf %72, %3 : vector<32x16xf32>
    %74 = vector.extract_strided_slice %72 {offsets = [0, 8], sizes = [32, 8], strides = [1, 1]} : vector<32x16xf32> to vector<32x8xf32>
    %75 = vector.extract_strided_slice %72 {offsets = [0, 0], sizes = [32, 8], strides = [1, 1]} : vector<32x16xf32> to vector<32x8xf32>
    %76 = tpu.concatenate %74, %75 in 1 : vector<32x8xf32>, vector<32x8xf32> -> vector<32x16xf32>
    %77 = arith.mulf %76, %4 : vector<32x16xf32>
    %78 = arith.addf %73, %77 : vector<32x16xf32>
    %79 = arith.truncf %78 : vector<32x16xf32> to vector<32x16xbf16>
    %80 = vector.extract_strided_slice %28 {offsets = [0, 16], sizes = [32, 16], strides = [1, 1]} : vector<32x64xf32> to vector<32x16xf32>
    %81 = arith.mulf %80, %3 : vector<32x16xf32>
    %82 = vector.extract_strided_slice %80 {offsets = [0, 8], sizes = [32, 8], strides = [1, 1]} : vector<32x16xf32> to vector<32x8xf32>
    %83 = vector.extract_strided_slice %80 {offsets = [0, 0], sizes = [32, 8], strides = [1, 1]} : vector<32x16xf32> to vector<32x8xf32>
    %84 = tpu.concatenate %82, %83 in 1 : vector<32x8xf32>, vector<32x8xf32> -> vector<32x16xf32>
    %85 = arith.mulf %84, %4 : vector<32x16xf32>
    %86 = arith.addf %81, %85 : vector<32x16xf32>
    %87 = arith.truncf %86 : vector<32x16xf32> to vector<32x16xbf16>
    %88 = vector.extract_strided_slice %29 {offsets = [0, 16], sizes = [32, 16], strides = [1, 1]} : vector<32x64xf32> to vector<32x16xf32>
    %89 = arith.truncf %88 : vector<32x16xf32> to vector<32x16xbf16>
    %cst_28 = arith.constant dense<0.000000e+00> : vector<32x32xf32>
    %90 = tpu.matmul %79, %87, %cst_28 {dimension_numbers = #tpu.dot_dimension_numbers<[1], [1], [0], [0], [0, 0, 1, 0], [], []>} : vector<32x16xbf16>, vector<32x16xbf16>, vector<32x32xf32> -> vector<32x32xf32>
    %91 = vector.broadcast %2 : vector<1x32xf32> to vector<32x32xf32>
    %92 = arith.addf %90, %91 : vector<32x32xf32>
    %cst_29 = arith.constant dense<0xFF800000> : vector<32xf32>
    %93 = vector.multi_reduction <maximumf>, %92, %cst_29 [1] : vector<32x32xf32> to vector<32xf32>
    %94 = vector.shape_cast %93 : vector<32xf32> to vector<32x1xf32>
    %95 = vector.broadcast %94 : vector<32x1xf32> to vector<32x32xf32>
    %96 = arith.subf %92, %95 : vector<32x32xf32>
    %97 = math.exp %96 : vector<32x32xf32>
    %cst_30 = arith.constant dense<0.000000e+00> : vector<32xf32>
    %98 = vector.multi_reduction <add>, %97, %cst_30 [1] : vector<32x32xf32> to vector<32xf32>
    %99 = vector.shape_cast %98 : vector<32xf32> to vector<32x1xf32>
    %100 = tpu.reciprocal %99 {approx = true} : vector<32x1xf32> -> vector<32x1xf32>
    %101 = vector.broadcast %100 : vector<32x1xf32> to vector<32x32xf32>
    %102 = arith.mulf %97, %101 : vector<32x32xf32>
    %103 = arith.truncf %102 : vector<32x32xf32> to vector<32x32xbf16>
    %c0_31 = arith.constant 0 : index
    %c1 = arith.constant 1 : index
    %c0_32 = arith.constant 0 : index
    %c0_33 = arith.constant 0 : index
    %104 = vector.load %arg16[%c0_31, %c1, %c0_32, %c0_33] : memref<1x4x32x32xbf16, #tpu.memory_space<vmem>>, vector<1x1x32x32xbf16>
    %105 = vector.shape_cast %104 : vector<1x1x32x32xbf16> to vector<32x32xbf16>
    %106 = vector.shape_cast %103 : vector<32x32xbf16> to vector<1x1x32x32xbf16>
    tpu.vector_store %arg16[%c0_31, %c1, %c0_32, %c0_33], %106 {strides = array<i32>} : memref<1x4x32x32xbf16, #tpu.memory_space<vmem>>, vector<1x1x32x32xbf16>,
    %107 = arith.truncf %102 : vector<32x32xf32> to vector<32x32xbf16>
    %cst_34 = arith.constant dense<0.000000e+00> : vector<32x16xf32>
    %108 = tpu.matmul %107, %89, %cst_34 {dimension_numbers = #tpu.dot_dimension_numbers<[1], [0], [0], [1], [0, 0, 1, 1], [], []>} : vector<32x32xbf16>, vector<32x16xbf16>, vector<32x16xf32> -> vector<32x16xf32>
    %109 = arith.truncf %108 : vector<32x16xf32> to vector<32x16xbf16>
    %c0_35 = arith.constant 0 : index
    %c16 = arith.constant 16 : index
    %110 = vector.load %arg17[%c0_35, %c16] : memref<32x64xbf16, #tpu.memory_space<vmem>>, vector<32x16xbf16>
    tpu.vector_store %arg17[%c0_35, %c16], %109 {strides = array<i32>} : memref<32x64xbf16, #tpu.memory_space<vmem>>, vector<32x16xbf16>,
    %111 = vector.extract_strided_slice %32 {offsets = [0, 32], sizes = [32, 16], strides = [1, 1]} : vector<32x64xf32> to vector<32x16xf32>
    %112 = arith.mulf %111, %3 : vector<32x16xf32>
    %113 = vector.extract_strided_slice %111 {offsets = [0, 8], sizes = [32, 8], strides = [1, 1]} : vector<32x16xf32> to vector<32x8xf32>
    %114 = vector.extract_strided_slice %111 {offsets = [0, 0], sizes = [32, 8], strides = [1, 1]} : vector<32x16xf32> to vector<32x8xf32>
    %115 = tpu.concatenate %113, %114 in 1 : vector<32x8xf32>, vector<32x8xf32> -> vector<32x16xf32>
    %116 = arith.mulf %115, %4 : vector<32x16xf32>
    %117 = arith.addf %112, %116 : vector<32x16xf32>
    %118 = arith.truncf %117 : vector<32x16xf32> to vector<32x16xbf16>
    %119 = vector.extract_strided_slice %28 {offsets = [0, 32], sizes = [32, 16], strides = [1, 1]} : vector<32x64xf32> to vector<32x16xf32>
    %120 = arith.mulf %119, %3 : vector<32x16xf32>
    %121 = vector.extract_strided_slice %119 {offsets = [0, 8], sizes = [32, 8], strides = [1, 1]} : vector<32x16xf32> to vector<32x8xf32>
    %122 = vector.extract_strided_slice %119 {offsets = [0, 0], sizes = [32, 8], strides = [1, 1]} : vector<32x16xf32> to vector<32x8xf32>
    %123 = tpu.concatenate %121, %122 in 1 : vector<32x8xf32>, vector<32x8xf32> -> vector<32x16xf32>
    %124 = arith.mulf %123, %4 : vector<32x16xf32>
    %125 = arith.addf %120, %124 : vector<32x16xf32>
    %126 = arith.truncf %125 : vector<32x16xf32> to vector<32x16xbf16>
    %127 = vector.extract_strided_slice %29 {offsets = [0, 32], sizes = [32, 16], strides = [1, 1]} : vector<32x64xf32> to vector<32x16xf32>
    %128 = arith.truncf %127 : vector<32x16xf32> to vector<32x16xbf16>
    %cst_36 = arith.constant dense<0.000000e+00> : vector<32x32xf32>
    %129 = tpu.matmul %118, %126, %cst_36 {dimension_numbers = #tpu.dot_dimension_numbers<[1], [1], [0], [0], [0, 0, 1, 0], [], []>} : vector<32x16xbf16>, vector<32x16xbf16>, vector<32x32xf32> -> vector<32x32xf32>
    %130 = vector.broadcast %2 : vector<1x32xf32> to vector<32x32xf32>
    %131 = arith.addf %129, %130 : vector<32x32xf32>
    %cst_37 = arith.constant dense<0xFF800000> : vector<32xf32>
    %132 = vector.multi_reduction <maximumf>, %131, %cst_37 [1] : vector<32x32xf32> to vector<32xf32>
    %133 = vector.shape_cast %132 : vector<32xf32> to vector<32x1xf32>
    %134 = vector.broadcast %133 : vector<32x1xf32> to vector<32x32xf32>
    %135 = arith.subf %131, %134 : vector<32x32xf32>
    %136 = math.exp %135 : vector<32x32xf32>
    %cst_38 = arith.constant dense<0.000000e+00> : vector<32xf32>
    %137 = vector.multi_reduction <add>, %136, %cst_38 [1] : vector<32x32xf32> to vector<32xf32>
    %138 = vector.shape_cast %137 : vector<32xf32> to vector<32x1xf32>
    %139 = tpu.reciprocal %138 {approx = true} : vector<32x1xf32> -> vector<32x1xf32>
    %140 = vector.broadcast %139 : vector<32x1xf32> to vector<32x32xf32>
    %141 = arith.mulf %136, %140 : vector<32x32xf32>
    %142 = arith.truncf %141 : vector<32x32xf32> to vector<32x32xbf16>
    %c0_39 = arith.constant 0 : index
    %c2 = arith.constant 2 : index
    %c0_40 = arith.constant 0 : index
    %c0_41 = arith.constant 0 : index
    %143 = vector.load %arg16[%c0_39, %c2, %c0_40, %c0_41] : memref<1x4x32x32xbf16, #tpu.memory_space<vmem>>, vector<1x1x32x32xbf16>
    %144 = vector.shape_cast %143 : vector<1x1x32x32xbf16> to vector<32x32xbf16>
    %145 = vector.shape_cast %142 : vector<32x32xbf16> to vector<1x1x32x32xbf16>
    tpu.vector_store %arg16[%c0_39, %c2, %c0_40, %c0_41], %145 {strides = array<i32>} : memref<1x4x32x32xbf16, #tpu.memory_space<vmem>>, vector<1x1x32x32xbf16>,
    %146 = arith.truncf %141 : vector<32x32xf32> to vector<32x32xbf16>
    %cst_42 = arith.constant dense<0.000000e+00> : vector<32x16xf32>
    %147 = tpu.matmul %146, %128, %cst_42 {dimension_numbers = #tpu.dot_dimension_numbers<[1], [0], [0], [1], [0, 0, 1, 1], [], []>} : vector<32x32xbf16>, vector<32x16xbf16>, vector<32x16xf32> -> vector<32x16xf32>
    %148 = arith.truncf %147 : vector<32x16xf32> to vector<32x16xbf16>
    %c0_43 = arith.constant 0 : index
    %c32 = arith.constant 32 : index
    %149 = vector.load %arg17[%c0_43, %c32] : memref<32x64xbf16, #tpu.memory_space<vmem>>, vector<32x16xbf16>
    tpu.vector_store %arg17[%c0_43, %c32], %148 {strides = array<i32>} : memref<32x64xbf16, #tpu.memory_space<vmem>>, vector<32x16xbf16>,
    %150 = vector.extract_strided_slice %32 {offsets = [0, 48], sizes = [32, 16], strides = [1, 1]} : vector<32x64xf32> to vector<32x16xf32>
    %151 = arith.mulf %150, %3 : vector<32x16xf32>
    %152 = vector.extract_strided_slice %150 {offsets = [0, 8], sizes = [32, 8], strides = [1, 1]} : vector<32x16xf32> to vector<32x8xf32>
    %153 = vector.extract_strided_slice %150 {offsets = [0, 0], sizes = [32, 8], strides = [1, 1]} : vector<32x16xf32> to vector<32x8xf32>
    %154 = tpu.concatenate %152, %153 in 1 : vector<32x8xf32>, vector<32x8xf32> -> vector<32x16xf32>
    %155 = arith.mulf %154, %4 : vector<32x16xf32>
    %156 = arith.addf %151, %155 : vector<32x16xf32>
    %157 = arith.truncf %156 : vector<32x16xf32> to vector<32x16xbf16>
    %158 = vector.extract_strided_slice %28 {offsets = [0, 48], sizes = [32, 16], strides = [1, 1]} : vector<32x64xf32> to vector<32x16xf32>
    %159 = arith.mulf %158, %3 : vector<32x16xf32>
    %160 = vector.extract_strided_slice %158 {offsets = [0, 8], sizes = [32, 8], strides = [1, 1]} : vector<32x16xf32> to vector<32x8xf32>
    %161 = vector.extract_strided_slice %158 {offsets = [0, 0], sizes = [32, 8], strides = [1, 1]} : vector<32x16xf32> to vector<32x8xf32>
    %162 = tpu.concatenate %160, %161 in 1 : vector<32x8xf32>, vector<32x8xf32> -> vector<32x16xf32>
    %163 = arith.mulf %162, %4 : vector<32x16xf32>
    %164 = arith.addf %159, %163 : vector<32x16xf32>
    %165 = arith.truncf %164 : vector<32x16xf32> to vector<32x16xbf16>
    %166 = vector.extract_strided_slice %29 {offsets = [0, 48], sizes = [32, 16], strides = [1, 1]} : vector<32x64xf32> to vector<32x16xf32>
    %167 = arith.truncf %166 : vector<32x16xf32> to vector<32x16xbf16>
    %cst_44 = arith.constant dense<0.000000e+00> : vector<32x32xf32>
    %168 = tpu.matmul %157, %165, %cst_44 {dimension_numbers = #tpu.dot_dimension_numbers<[1], [1], [0], [0], [0, 0, 1, 0], [], []>} : vector<32x16xbf16>, vector<32x16xbf16>, vector<32x32xf32> -> vector<32x32xf32>
    %169 = vector.broadcast %2 : vector<1x32xf32> to vector<32x32xf32>
    %170 = arith.addf %168, %169 : vector<32x32xf32>
    %cst_45 = arith.constant dense<0xFF800000> : vector<32xf32>
    %171 = vector.multi_reduction <maximumf>, %170, %cst_45 [1] : vector<32x32xf32> to vector<32xf32>
    %172 = vector.shape_cast %171 : vector<32xf32> to vector<32x1xf32>
    %173 = vector.broadcast %172 : vector<32x1xf32> to vector<32x32xf32>
    %174 = arith.subf %170, %173 : vector<32x32xf32>
    %175 = math.exp %174 : vector<32x32xf32>
    %cst_46 = arith.constant dense<0.000000e+00> : vector<32xf32>
    %176 = vector.multi_reduction <add>, %175, %cst_46 [1] : vector<32x32xf32> to vector<32xf32>
    %177 = vector.shape_cast %176 : vector<32xf32> to vector<32x1xf32>
    %178 = tpu.reciprocal %177 {approx = true} : vector<32x1xf32> -> vector<32x1xf32>
    %179 = vector.broadcast %178 : vector<32x1xf32> to vector<32x32xf32>
    %180 = arith.mulf %175, %179 : vector<32x32xf32>
    %181 = arith.truncf %180 : vector<32x32xf32> to vector<32x32xbf16>
    %c0_47 = arith.constant 0 : index
    %c3 = arith.constant 3 : index
    %c0_48 = arith.constant 0 : index
    %c0_49 = arith.constant 0 : index
    %182 = vector.load %arg16[%c0_47, %c3, %c0_48, %c0_49] : memref<1x4x32x32xbf16, #tpu.memory_space<vmem>>, vector<1x1x32x32xbf16>
    %183 = vector.shape_cast %182 : vector<1x1x32x32xbf16> to vector<32x32xbf16>
    %184 = vector.shape_cast %181 : vector<32x32xbf16> to vector<1x1x32x32xbf16>
    tpu.vector_store %arg16[%c0_47, %c3, %c0_48, %c0_49], %184 {strides = array<i32>} : memref<1x4x32x32xbf16, #tpu.memory_space<vmem>>, vector<1x1x32x32xbf16>,
    %185 = arith.truncf %180 : vector<32x32xf32> to vector<32x32xbf16>
    %cst_50 = arith.constant dense<0.000000e+00> : vector<32x16xf32>
    %186 = tpu.matmul %185, %167, %cst_50 {dimension_numbers = #tpu.dot_dimension_numbers<[1], [0], [0], [1], [0, 0, 1, 1], [], []>} : vector<32x32xbf16>, vector<32x16xbf16>, vector<32x16xf32> -> vector<32x16xf32>
    %187 = arith.truncf %186 : vector<32x16xf32> to vector<32x16xbf16>
    %c0_51 = arith.constant 0 : index
    %c48 = arith.constant 48 : index
    %188 = vector.load %arg17[%c0_51, %c48] : memref<32x64xbf16, #tpu.memory_space<vmem>>, vector<32x16xbf16>
    tpu.vector_store %arg17[%c0_51, %c48], %187 {strides = array<i32>} : memref<32x64xbf16, #tpu.memory_space<vmem>>, vector<32x16xbf16>,
    %c0_52 = arith.constant 0 : index
    %c0_53 = arith.constant 0 : index
    %189 = vector.load %arg17[%c0_52, %c0_53] : memref<32x64xbf16, #tpu.memory_space<vmem>>, vector<32x64xbf16>
    %c0_54 = arith.constant 0 : index
    %c0_55 = arith.constant 0 : index
    %190 = vector.load %arg9[%c0_54, %c0_55] : memref<64x64xbf16, #tpu.memory_space<vmem>>, vector<64x64xbf16>
    %cst_56 = arith.constant dense<0.000000e+00> : vector<32x64xf32>
    %191 = tpu.matmul %189, %190, %cst_56 {dimension_numbers = #tpu.dot_dimension_numbers<[1], [0], [0], [1], [0, 0, 1, 1], [], []>} : vector<32x64xbf16>, vector<64x64xbf16>, vector<32x64xf32> -> vector<32x64xf32>
    %c0_57 = arith.constant 0 : index
    %c0_58 = arith.constant 0 : index
    %192 = vector.load %arg10[%c0_57, %c0_58] : memref<1x64xf32, #tpu.memory_space<vmem>>, vector<1x64xf32>
    %193 = vector.broadcast %192 : vector<1x64xf32> to vector<32x64xf32>
    %194 = arith.addf %191, %193 : vector<32x64xf32>
    %195 = arith.addf %9, %194 : vector<32x64xf32>
    %196 = arith.mulf %195, %195 : vector<32x64xf32>
    %cst_59 = arith.constant dense<0.000000e+00> : vector<32xf32>
    %197 = vector.multi_reduction <add>, %196, %cst_59 [1] : vector<32x64xf32> to vector<32xf32>
    %198 = vector.shape_cast %197 : vector<32xf32> to vector<32x1xf32>
    %cst_60 = arith.constant 6.400000e+01 : f32
    %199 = vector.broadcast %cst_60 : f32 to vector<32x1xf32>
    %200 = arith.divf %198, %199 : vector<32x1xf32>
    %cst_61 = arith.constant 9.99999997E-7 : f32
    %201 = vector.broadcast %cst_61 : f32 to vector<32x1xf32>
    %202 = arith.addf %200, %201 : vector<32x1xf32>
    %203 = math.rsqrt %202 : vector<32x1xf32>
    %204 = vector.broadcast %203 : vector<32x1xf32> to vector<32x64xf32>
    %205 = arith.mulf %195, %204 : vector<32x64xf32>
    %206 = vector.broadcast %0 : vector<1x64xf32> to vector<32x64xf32>
    %207 = arith.mulf %205, %206 : vector<32x64xf32>
    %208 = arith.truncf %207 : vector<32x64xf32> to vector<32x64xbf16>
    %c0_62 = arith.constant 0 : index
    %c0_63 = arith.constant 0 : index
    %209 = vector.load %arg11[%c0_62, %c0_63] : memref<64x128xbf16, #tpu.memory_space<vmem>>, vector<64x128xbf16>
    %cst_64 = arith.constant dense<0.000000e+00> : vector<32x128xf32>
    %210 = tpu.matmul %208, %209, %cst_64 {dimension_numbers = #tpu.dot_dimension_numbers<[1], [0], [0], [1], [0, 0, 1, 1], [], []>} : vector<32x64xbf16>, vector<64x128xbf16>, vector<32x128xf32> -> vector<32x128xf32>
    %c0_65 = arith.constant 0 : index
    %c0_66 = arith.constant 0 : index
    %211 = vector.load %arg12[%c0_65, %c0_66] : memref<1x128xf32, #tpu.memory_space<vmem>>, vector<1x128xf32>
    %212 = vector.broadcast %211 : vector<1x128xf32> to vector<32x128xf32>
    %213 = arith.addf %210, %212 : vector<32x128xf32>
    %cst_67 = arith.constant 0.000000e+00 : f32
    %214 = vector.broadcast %cst_67 : f32 to vector<32x128xf32>
    %215 = arith.maximumf %213, %214 : vector<32x128xf32>
    %216 = arith.truncf %215 : vector<32x128xf32> to vector<32x128xbf16>
    %c0_68 = arith.constant 0 : index
    %c0_69 = arith.constant 0 : index
    %217 = vector.load %arg13[%c0_68, %c0_69] : memref<128x64xbf16, #tpu.memory_space<vmem>>, vector<128x64xbf16>
    %cst_70 = arith.constant dense<0.000000e+00> : vector<32x64xf32>
    %218 = tpu.matmul %216, %217, %cst_70 {dimension_numbers = #tpu.dot_dimension_numbers<[1], [0], [0], [1], [0, 0, 1, 1], [], []>} : vector<32x128xbf16>, vector<128x64xbf16>, vector<32x64xf32> -> vector<32x64xf32>
    %c0_71 = arith.constant 0 : index
    %c0_72 = arith.constant 0 : index
    %219 = vector.load %arg14[%c0_71, %c0_72] : memref<1x64xf32, #tpu.memory_space<vmem>>, vector<1x64xf32>
    %220 = vector.broadcast %219 : vector<1x64xf32> to vector<32x64xf32>
    %221 = arith.addf %218, %220 : vector<32x64xf32>
    %222 = arith.addf %195, %221 : vector<32x64xf32>
    %c0_73 = arith.constant 0 : index
    %c0_74 = arith.constant 0 : index
    %c0_75 = arith.constant 0 : index
    %223 = vector.load %arg15[%c0_73, %c0_74, %c0_75] : memref<1x32x64xf32, #tpu.memory_space<vmem>>, vector<1x32x64xf32>
    %224 = vector.shape_cast %223 : vector<1x32x64xf32> to vector<32x64xf32>
    %225 = vector.shape_cast %222 : vector<32x64xf32> to vector<1x32x64xf32>
    tpu.vector_store %arg15[%c0_73, %c0_74, %c0_75], %225 {strides = array<i32>} : memref<1x32x64xf32, #tpu.memory_space<vmem>>, vector<1x32x64xf32>,
    return
  }
  func.func @transform_0(%arg0: i32, %arg1: i32) -> (i32, i32, i32) {
    %c0_i32 = arith.constant 0 : i32
    %c0_i32_0 = arith.constant 0 : i32
    %c0_i32_1 = arith.constant 0 : i32
    return %arg0, %c0_i32, %c0_i32_0 : i32, i32, i32
  }
  func.func @transform_1(%arg0: i32, %arg1: i32) -> (i32, i32, i32) {
    %c0_i32 = arith.constant 0 : i32
    %c0_i32_0 = arith.constant 0 : i32
    %c0_i32_1 = arith.constant 0 : i32
    return %arg0, %c0_i32, %c0_i32_0 : i32, i32, i32
  }
  func.func @transform_2(%arg0: i32, %arg1: i32) -> (i32, i32) {
    %c0_i32 = arith.constant 0 : i32
    %c0_i32_0 = arith.constant 0 : i32
    %c0_i32_1 = arith.constant 0 : i32
    return %c0_i32, %c0_i32_0 : i32, i32
  }
  func.func @transform_3(%arg0: i32, %arg1: i32) -> (i32, i32) {
    %c0_i32 = arith.constant 0 : i32
    %c0_i32_0 = arith.constant 0 : i32
    %c0_i32_1 = arith.constant 0 : i32
    return %c0_i32, %c0_i32_0 : i32, i32
  }
  func.func @transform_4(%arg0: i32, %arg1: i32) -> (i32, i32) {
    %c0_i32 = arith.constant 0 : i32
    %c0_i32_0 = arith.constant 0 : i32
    %c0_i32_1 = arith.constant 0 : i32
    return %c0_i32, %c0_i32_0 : i32, i32
  }
  func.func @transform_5(%arg0: i32, %arg1: i32) -> (i32, i32) {
    %c0_i32 = arith.constant 0 : i32
    %c0_i32_0 = arith.constant 0 : i32
    %c0_i32_1 = arith.constant 0 : i32
    return %c0_i32, %c0_i32_0 : i32, i32
  }
  func.func @transform_6(%arg0: i32, %arg1: i32) -> (i32, i32) {
    %c0_i32 = arith.constant 0 : i32
    %c0_i32_0 = arith.constant 0 : i32
    %c0_i32_1 = arith.constant 0 : i32
    return %c0_i32, %c0_i32_0 : i32, i32
  }
  func.func @transform_7(%arg0: i32, %arg1: i32) -> (i32, i32) {
    %c0_i32 = arith.constant 0 : i32
    %c0_i32_0 = arith.constant 0 : i32
    %c0_i32_1 = arith.constant 0 : i32
    return %c0_i32, %c0_i32_0 : i32, i32
  }
  func.func @transform_8(%arg0: i32, %arg1: i32) -> (i32, i32) {
    %c0_i32 = arith.constant 0 : i32
    %c0_i32_0 = arith.constant 0 : i32
    %c0_i32_1 = arith.constant 0 : i32
    return %c0_i32, %c0_i32_0 : i32, i32
  }
  func.func @transform_9(%arg0: i32, %arg1: i32) -> (i32, i32) {
    %c0_i32 = arith.constant 0 : i32
    %c0_i32_0 = arith.constant 0 : i32
    %c0_i32_1 = arith.constant 0 : i32
    return %c0_i32, %c0_i32_0 : i32, i32
  }
  func.func @transform_10(%arg0: i32, %arg1: i32) -> (i32, i32) {
    %c0_i32 = arith.constant 0 : i32
    %c0_i32_0 = arith.constant 0 : i32
    %c0_i32_1 = arith.constant 0 : i32
    return %c0_i32, %c0_i32_0 : i32, i32
  }
  func.func @transform_11(%arg0: i32, %arg1: i32) -> (i32, i32) {
    %c0_i32 = arith.constant 0 : i32
    %c0_i32_0 = arith.constant 0 : i32
    %c0_i32_1 = arith.constant 0 : i32
    return %c0_i32, %c0_i32_0 : i32, i32
  }
  func.func @transform_12(%arg0: i32, %arg1: i32) -> (i32, i32) {
    %c0_i32 = arith.constant 0 : i32
    %c0_i32_0 = arith.constant 0 : i32
    %c0_i32_1 = arith.constant 0 : i32
    return %c0_i32, %c0_i32_0 : i32, i32
  }
  func.func @transform_13(%arg0: i32, %arg1: i32) -> (i32, i32, i32) {
    %c0_i32 = arith.constant 0 : i32
    %c0_i32_0 = arith.constant 0 : i32
    return %arg0, %arg1, %c0_i32 : i32, i32, i32
  }
  func.func @transform_14(%arg0: i32, %arg1: i32) -> (i32, i32, i32, i32) {
    %c0_i32 = arith.constant 0 : i32
    %c0_i32_0 = arith.constant 0 : i32
    %c0_i32_1 = arith.constant 0 : i32
    return %arg0, %c0_i32, %arg1, %c0_i32_0 : i32, i32, i32, i32
  }
}

</mosaic_0001>

<llo_original>
// kernel: tpu_custom_call.1
$region0: #{tpu_custom_call.1}
  #allocation0 [shape = 'u32[]', space=smem, size = 0x4, offset = 0x4, fixed_abs, tag = 'smem constant byte address 0x4 - core index']
  #allocation1 [shape = 'u32[144,128]{1,0:T(1,128)}', space=vmem, size = 0x12000, scoped, tag = 'internal scratch']
  #allocation2 [shape = 'bf16[32,64]{1,0:T(16,128)(2,1)}', space=vmem, size = 0x2000, scoped, tag = 'scratch operand']
  %s0 = inlined_call_operand.vmem [shape: f32[2,32,64], index: 0, kind: input, shape index: {}]
  %s1 = inlined_call_operand.vmem [shape: f32[2,1,32], index: 1, kind: input, shape index: {}]
  %s2 = inlined_call_operand.vmem [shape: f32[32,16], index: 2, kind: input, shape index: {}]
  %s3 = inlined_call_operand.vmem [shape: f32[32,16], index: 3, kind: input, shape index: {}]
  %s4 = inlined_call_operand.hbm [shape: f32[1,64], index: 4, kind: input, shape index: {}]
  %s5 = inlined_call_operand.vmem [shape: bf16[64,192], index: 5, kind: input, shape index: {}]
  %s6 = inlined_call_operand.hbm [shape: f32[1,192], index: 6, kind: input, shape index: {}]
  %s7 = inlined_call_operand.vmem [shape: bf16[64,64], index: 7, kind: input, shape index: {}]
  %s8 = inlined_call_operand.hbm [shape: f32[1,64], index: 8, kind: input, shape index: {}]
  %s9 = inlined_call_operand.vmem [shape: bf16[64,128], index: 9, kind: input, shape index: {}]
  %s10 = inlined_call_operand.vmem [shape: f32[1,128], index: 10, kind: input, shape index: {}]
  %s11 = inlined_call_operand.vmem [shape: bf16[128,64], index: 11, kind: input, shape index: {}]
  %s12 = inlined_call_operand.vmem [shape: f32[1,64], index: 12, kind: input, shape index: {}]
  %s13 = inlined_call_operand.hbm [shape: f32[2,32,64], index: 13, kind: output, shape index: {0}]
  %s14 = inlined_call_operand.hbm [shape: bf16[2,4,32,32], index: 14, kind: output, shape index: {1}]
  %15 = xla_tuple %s13, %s14
  %s16 = sld [smem:[#allocation0]]
  $region105: #{tpu_custom_call.1} parent=0
    _
  %s18 = ssub.s32 1, %s16
  %s19 = scalar_select 0, %s18, %s16
  $region1: #{tpu_custom_call.1} parent=0
    #allocation3 [shape = 'u8[512]{0}', space=vmem, size = 0x400, scoped, tag = 'input window, operand 4, single buffered']
    #allocation4 [shape = 's32[2]{0}', space=sflag, size = 0x8, scoped, tag = 'scoped memory for tpu_custom_call.1']
    #allocation5 [shape = 's32[2]{0}', space=sflag, size = 0x8, scoped, tag = 'scoped memory for tpu_custom_call.1']
    #allocation6 [shape = 'u8[1024]{0}', space=vmem, size = 0x400, scoped, tag = 'input window, operand 6, single buffered']
    #allocation7 [shape = 's32[1]{0}', space=sflag, size = 0x4, scoped, tag = 'scoped memory for tpu_custom_call.1']
    #allocation8 [shape = 'u8[512]{0}', space=vmem, size = 0x400, scoped, tag = 'input window, operand 8, single buffered']
    #allocation9 [shape = 'u8[32768]{0}', space=vmem, size = 0x8000, scoped, tag = 'output window, operand 0']
    #allocation10 [shape = 'u8[65536]{0}', space=vmem, size = 0x10000, scoped, tag = 'output window, operand 1']
    #allocation11 [shape = 's32[2]{0}', space=sflag, size = 0x8, scoped, tag = 'scoped memory for tpu_custom_call.1']
    %20 = vsyncpa [#allocation4], 0
    %21 = vsyncpa [#allocation7], 0
    %22 = vsyncpa [#allocation5], 0
    %s23 = scalar_lea.sflag [#allocation5], 1
    %24 = vsyncpa %s23, 0
    %25 = vsyncpa [#allocation11], 0
    %s26 = scalar_lea.sflag [#allocation11], 1
    %27 = vsyncpa %s26, 0
    loop: start=0, step=1, limit=4
    $region2: #{tpu_custom_call.1} parent=1 // loop_pre_header
      _
    $region3: #{tpu_custom_call.1} parent=1 // loop_header
      %s29 = sphi 0, %s33
      %p30 = scmp.ge.s32.totalorder %s29, 4
      %s36 = sphi 0, %s48
      %s37 = sphi 0, %s44
      %s38 = sphi 0, %s36
      %s39 = sphi 0, %s37
      %s40 = sphi 0, %s38
      %s41 = sphi 0, %s39
      %s51 = sphi 0, %s53
      %s54 = sphi 0, %s51
      %s55 = sphi 0, %s54
      %s71 = sphi 0, %s55
      %s77 = sphi 0, %s79
      %s80 = sphi 0, %s77
      %s81 = sphi 0, %s80
      %s97 = sphi 0, %s81
      %s101 = sphi 0, %s101
      %s103 = sphi 0, %s101
      %s104 = sphi 0, %s103
      %s118 = sphi 0, %s104
      %s122 = sphi 0, %s122
      %s124 = sphi 0, %s122
      %s125 = sphi 0, %s124
      %s139 = sphi 0, %s125
      %s143 = sphi 0, %s143
      %s145 = sphi 0, %s143
      %s146 = sphi 0, %s145
      %s160 = sphi 0, %s146
      %s164 = sphi 0, %s164
      %s166 = sphi 0, %s164
      %s167 = sphi 0, %s166
      %s181 = sphi 0, %s167
      %s185 = sphi 0, %s185
      %s187 = sphi 0, %s185
      %s188 = sphi 0, %s187
      %s202 = sphi 0, %s188
      %s206 = sphi 0, %s206
      %s208 = sphi 0, %s206
      %s209 = sphi 0, %s208
      %s223 = sphi 0, %s209
      %s227 = sphi 0, %s227
      %s229 = sphi 0, %s227
      %s230 = sphi 0, %s229
      %s244 = sphi 0, %s230
      %s248 = sphi 0, %s248
      %s250 = sphi 0, %s248
      %s251 = sphi 0, %s250
      %s265 = sphi 0, %s251
      %s269 = sphi 0, %s269
      %s271 = sphi 0, %s269
      %s272 = sphi 0, %s271
      %s286 = sphi 0, %s272
      %s290 = sphi 0, %s290
      %s292 = sphi 0, %s290
      %s293 = sphi 0, %s292
      %s307 = sphi 0, %s293
      %s311 = sphi 0, %s311
      %s313 = sphi 0, %s311
      %s314 = sphi 0, %s313
      %s328 = sphi 0, %s314
      %s336 = sphi 0, %s338
      %s339 = sphi 0, %s336
      %s340 = sphi 0, %s339
      %s356 = sphi 0, %s340
      %s364 = sphi 0, %s366
      %s367 = sphi 0, %s364
      %s368 = sphi 0, %s367
      %s384 = sphi 0, %s368
    $region4: #{tpu_custom_call.1} parent=1 // loop_header_branch
      %32 = sbr.rel (%p30) target = $region8
    $region5: #{tpu_custom_call.1} parent=1 // loop_body
      %s34 = ssub.s32 %s29, 1
      %s35 = ssub.s32 %s29, 2
      %s42 = sadd.s32 1, %s37
      %p43 = scmp.ge.s32.totalorder %s42, 1
      %s44 = scalar_select %p43, 0, %s42
      %s45 = sadd.s32 1, %s36
      %s46 = scalar_select %p43, %s45, %s36
      %p47 = scmp.ge.s32.totalorder %s46, 2
      %s48 = scalar_select %p47, 0, %s46
      %s49 = ssub.s32 %s36, %s48
      %p50 = scmp.eq.s32.totalorder %s49, 0
      %s52 = sadd.s32 %s51, 1
      %s53 = scalar_select %p50, %s51, %s52
      %p56 = pneg %p50
      %p57 = scmp.eq.s32.totalorder %s29, 1
      %p58 = por %p56, %p57
      %p59 = scmp.ne.s32.totalorder %s51, %s54
      %p60 = scmp.eq.s32.totalorder %s29, 0
      %p61 = por %p59, %p60
      %p62 = scmp.ne.s32.totalorder %s51, %s54
      %p63 = scmp.eq.s32.totalorder %s34, 1
      %p64 = por %p62, %p63
      %p65 = scmp.ne.s32.totalorder %s54, %s55
      %p66 = scmp.eq.s32.totalorder %s34, 0
      %p67 = por %p65, %p66
      %p68 = scmp.ne.s32.totalorder %s54, %s55
      %p69 = scmp.eq.s32.totalorder %s35, 1
      %p70 = por %p68, %p69
      %p72 = scmp.ne.s32.totalorder %s55, %s71
      %p73 = scmp.eq.s32.totalorder %s35, 0
      %p74 = por %p72, %p73
      %s75 = ssub.s32 %s36, %s48
      %p76 = scmp.eq.s32.totalorder %s75, 0
      %s78 = sadd.s32 %s77, 1
      %s79 = scalar_select %p76, %s77, %s78
      %p82 = pneg %p76
      %p83 = scmp.eq.s32.totalorder %s29, 1
      %p84 = por %p82, %p83
      %p85 = scmp.ne.s32.totalorder %s77, %s80
      %p86 = scmp.eq.s32.totalorder %s29, 0
      %p87 = por %p85, %p86
      %p88 = scmp.ne.s32.totalorder %s77, %s80
      %p89 = scmp.eq.s32.totalorder %s34, 1
      %p90 = por %p88, %p89
      %p91 = scmp.ne.s32.totalorder %s80, %s81
      %p92 = scmp.eq.s32.totalorder %s34, 0
      %p93 = por %p91, %p92
      %p94 = scmp.ne.s32.totalorder %s80, %s81
      %p95 = scmp.eq.s32.totalorder %s35, 1
      %p96 = por %p94, %p95
      %p98 = scmp.ne.s32.totalorder %s81, %s97
      %p99 = scmp.eq.s32.totalorder %s35, 0
      %p100 = por %p98, %p99
      %s102 = sadd.s32 %s101, 1
      %p105 = scmp.eq.s32.totalorder %s29, 1
      %p106 = scmp.ne.s32.totalorder %s101, %s103
      %p107 = scmp.eq.s32.totalorder %s29, 0
      %p108 = por %p106, %p107
      %p109 = scmp.ne.s32.totalorder %s101, %s103
      %p110 = scmp.eq.s32.totalorder %s34, 1
      %p111 = por %p109, %p110
      %p112 = scmp.ne.s32.totalorder %s103, %s104
      %p113 = scmp.eq.s32.totalorder %s34, 0
      %p114 = por %p112, %p113
      %p115 = scmp.ne.s32.totalorder %s103, %s104
      %p116 = scmp.eq.s32.totalorder %s35, 1
      %p117 = por %p115, %p116
      %p119 = scmp.ne.s32.totalorder %s104, %s118
      %p120 = scmp.eq.s32.totalorder %s35, 0
      %p121 = por %p119, %p120
      %s123 = sadd.s32 %s122, 1
      %p126 = scmp.eq.s32.totalorder %s29, 1
      %p127 = scmp.ne.s32.totalorder %s122, %s124
      %p128 = scmp.eq.s32.totalorder %s29, 0
      %p129 = por %p127, %p128
      %p130 = scmp.ne.s32.totalorder %s122, %s124
      %p131 = scmp.eq.s32.totalorder %s34, 1
      %p132 = por %p130, %p131
      %p133 = scmp.ne.s32.totalorder %s124, %s125
      %p134 = scmp.eq.s32.totalorder %s34, 0
      %p135 = por %p133, %p134
      %p136 = scmp.ne.s32.totalorder %s124, %s125
      %p137 = scmp.eq.s32.totalorder %s35, 1
      %p138 = por %p136, %p137
      %p140 = scmp.ne.s32.totalorder %s125, %s139
      %p141 = scmp.eq.s32.totalorder %s35, 0
      %p142 = por %p140, %p141
      %s144 = sadd.s32 %s143, 1
      %p147 = scmp.eq.s32.totalorder %s29, 1
      %p148 = scmp.ne.s32.totalorder %s143, %s145
      %p149 = scmp.eq.s32.totalorder %s29, 0
      %p150 = por %p148, %p149
      %p151 = scmp.ne.s32.totalorder %s143, %s145
      %p152 = scmp.eq.s32.totalorder %s34, 1
      %p153 = por %p151, %p152
      %p154 = scmp.ne.s32.totalorder %s145, %s146
      %p155 = scmp.eq.s32.totalorder %s34, 0
      %p156 = por %p154, %p155
      %p157 = scmp.ne.s32.totalorder %s145, %s146
      %p158 = scmp.eq.s32.totalorder %s35, 1
      %p159 = por %p157, %p158
      %p161 = scmp.ne.s32.totalorder %s146, %s160
      %p162 = scmp.eq.s32.totalorder %s35, 0
      %p163 = por %p161, %p162
      %s165 = sadd.s32 %s164, 1
      %p168 = scmp.eq.s32.totalorder %s29, 1
      %p169 = scmp.ne.s32.totalorder %s164, %s166
      %p170 = scmp.eq.s32.totalorder %s29, 0
      %p171 = por %p169, %p170
      %p172 = scmp.ne.s32.totalorder %s164, %s166
      %p173 = scmp.eq.s32.totalorder %s34, 1
      %p174 = por %p172, %p173
      %p175 = scmp.ne.s32.totalorder %s166, %s167
      %p176 = scmp.eq.s32.totalorder %s34, 0
      %p177 = por %p175, %p176
      %p178 = scmp.ne.s32.totalorder %s166, %s167
      %p179 = scmp.eq.s32.totalorder %s35, 1
      %p180 = por %p178, %p179
      %p182 = scmp.ne.s32.totalorder %s167, %s181
      %p183 = scmp.eq.s32.totalorder %s35, 0
      %p184 = por %p182, %p183
      %s186 = sadd.s32 %s185, 1
      %p189 = scmp.eq.s32.totalorder %s29, 1
      %p190 = scmp.ne.s32.totalorder %s185, %s187
      %p191 = scmp.eq.s32.totalorder %s29, 0
      %p192 = por %p190, %p191
      %p193 = scmp.ne.s32.totalorder %s185, %s187
      %p194 = scmp.eq.s32.totalorder %s34, 1
      %p195 = por %p193, %p194
      %p196 = scmp.ne.s32.totalorder %s187, %s188
      %p197 = scmp.eq.s32.totalorder %s34, 0
      %p198 = por %p196, %p197
      %p199 = scmp.ne.s32.totalorder %s187, %s188
      %p200 = scmp.eq.s32.totalorder %s35, 1
      %p201 = por %p199, %p200
      %p203 = scmp.ne.s32.totalorder %s188, %s202
      %p204 = scmp.eq.s32.totalorder %s35, 0
      %p205 = por %p203, %p204
      %s207 = sadd.s32 %s206, 1
      %p210 = scmp.eq.s32.totalorder %s29, 1
      %p211 = scmp.ne.s32.totalorder %s206, %s208
      %p212 = scmp.eq.s32.totalorder %s29, 0
      %p213 = por %p211, %p212
      %p214 = scmp.ne.s32.totalorder %s206, %s208
      %p215 = scmp.eq.s32.totalorder %s34, 1
      %p216 = por %p214, %p215
      %p217 = scmp.ne.s32.totalorder %s208, %s209
      %p218 = scmp.eq.s32.totalorder %s34, 0
      %p219 = por %p217, %p218
      %p220 = scmp.ne.s32.totalorder %s208, %s209
      %p221 = scmp.eq.s32.totalorder %s35, 1
      %p222 = por %p220, %p221
      %p224 = scmp.ne.s32.totalorder %s209, %s223
      %p225 = scmp.eq.s32.totalorder %s35, 0
      %p226 = por %p224, %p225
      %s228 = sadd.s32 %s227, 1
      %p231 = scmp.eq.s32.totalorder %s29, 1
      %p232 = scmp.ne.s32.totalorder %s227, %s229
      %p233 = scmp.eq.s32.totalorder %s29, 0
      %p234 = por %p232, %p233
      %p235 = scmp.ne.s32.totalorder %s227, %s229
      %p236 = scmp.eq.s32.totalorder %s34, 1
      %p237 = por %p235, %p236
      %p238 = scmp.ne.s32.totalorder %s229, %s230
      %p239 = scmp.eq.s32.totalorder %s34, 0
      %p240 = por %p238, %p239
      %p241 = scmp.ne.s32.totalorder %s229, %s230
      %p242 = scmp.eq.s32.totalorder %s35, 1
      %p243 = por %p241, %p242
      %p245 = scmp.ne.s32.totalorder %s230, %s244
      %p246 = scmp.eq.s32.totalorder %s35, 0
      %p247 = por %p245, %p246
      %s249 = sadd.s32 %s248, 1
      %p252 = scmp.eq.s32.totalorder %s29, 1
      %p253 = scmp.ne.s32.totalorder %s248, %s250
      %p254 = scmp.eq.s32.totalorder %s29, 0
      %p255 = por %p253, %p254
      %p256 = scmp.ne.s32.totalorder %s248, %s250
      %p257 = scmp.eq.s32.totalorder %s34, 1
      %p258 = por %p256, %p257
      %p259 = scmp.ne.s32.totalorder %s250, %s251
      %p260 = scmp.eq.s32.totalorder %s34, 0
      %p261 = por %p259, %p260
      %p262 = scmp.ne.s32.totalorder %s250, %s251
      %p263 = scmp.eq.s32.totalorder %s35, 1
      %p264 = por %p262, %p263
      %p266 = scmp.ne.s32.totalorder %s251, %s265
      %p267 = scmp.eq.s32.totalorder %s35, 0
      %p268 = por %p266, %p267
      %s270 = sadd.s32 %s269, 1
      %p273 = scmp.eq.s32.totalorder %s29, 1
      %p274 = scmp.ne.s32.totalorder %s269, %s271
      %p275 = scmp.eq.s32.totalorder %s29, 0
      %p276 = por %p274, %p275
      %p277 = scmp.ne.s32.totalorder %s269, %s271
      %p278 = scmp.eq.s32.totalorder %s34, 1
      %p279 = por %p277, %p278
      %p280 = scmp.ne.s32.totalorder %s271, %s272
      %p281 = scmp.eq.s32.totalorder %s34, 0
      %p282 = por %p280, %p281
      %p283 = scmp.ne.s32.totalorder %s271, %s272
      %p284 = scmp.eq.s32.totalorder %s35, 1
      %p285 = por %p283, %p284
      %p287 = scmp.ne.s32.totalorder %s272, %s286
      %p288 = scmp.eq.s32.totalorder %s35, 0
      %p289 = por %p287, %p288
      %s291 = sadd.s32 %s290, 1
      %p294 = scmp.eq.s32.totalorder %s29, 1
      %p295 = scmp.ne.s32.totalorder %s290, %s292
      %p296 = scmp.eq.s32.totalorder %s29, 0
      %p297 = por %p295, %p296
      %p298 = scmp.ne.s32.totalorder %s290, %s292
      %p299 = scmp.eq.s32.totalorder %s34, 1
      %p300 = por %p298, %p299
      %p301 = scmp.ne.s32.totalorder %s292, %s293
      %p302 = scmp.eq.s32.totalorder %s34, 0
      %p303 = por %p301, %p302
      %p304 = scmp.ne.s32.totalorder %s292, %s293
      %p305 = scmp.eq.s32.totalorder %s35, 1
      %p306 = por %p304, %p305
      %p308 = scmp.ne.s32.totalorder %s293, %s307
      %p309 = scmp.eq.s32.totalorder %s35, 0
      %p310 = por %p308, %p309
      %s312 = sadd.s32 %s311, 1
      %p315 = scmp.eq.s32.totalorder %s29, 1
      %p316 = scmp.ne.s32.totalorder %s311, %s313
      %p317 = scmp.eq.s32.totalorder %s29, 0
      %p318 = por %p316, %p317
      %p319 = scmp.ne.s32.totalorder %s311, %s313
      %p320 = scmp.eq.s32.totalorder %s34, 1
      %p321 = por %p319, %p320
      %p322 = scmp.ne.s32.totalorder %s313, %s314
      %p323 = scmp.eq.s32.totalorder %s34, 0
      %p324 = por %p322, %p323
      %p325 = scmp.ne.s32.totalorder %s313, %s314
      %p326 = scmp.eq.s32.totalorder %s35, 1
      %p327 = por %p325, %p326
      %p329 = scmp.ne.s32.totalorder %s314, %s328
      %p330 = scmp.eq.s32.totalorder %s35, 0
      %p331 = por %p329, %p330
      %s332 = ssub.s32 %s36, %s48
      %s333 = ssub.s32 %s37, %s44
      %s334 = sor.u32 %s332, %s333
      %p335 = scmp.eq.s32.totalorder %s334, 0
      %s337 = sadd.s32 %s336, 1
      %s338 = scalar_select %p335, %s336, %s337
      %p341 = pneg %p335
      %p342 = scmp.eq.s32.totalorder %s29, 1
      %p343 = por %p341, %p342
      %p344 = scmp.ne.s32.totalorder %s336, %s339
      %p345 = scmp.eq.s32.totalorder %s29, 0
      %p346 = por %p344, %p345
      %p347 = scmp.ne.s32.totalorder %s336, %s339
      %p348 = scmp.eq.s32.totalorder %s34, 1
      %p349 = por %p347, %p348
      %p350 = scmp.ne.s32.totalorder %s339, %s340
      %p351 = scmp.eq.s32.totalorder %s34, 0
      %p352 = por %p350, %p351
      %p353 = scmp.ne.s32.totalorder %s339, %s340
      %p354 = scmp.eq.s32.totalorder %s35, 1
      %p355 = por %p353, %p354
      %p357 = scmp.ne.s32.totalorder %s340, %s356
      %p358 = scmp.eq.s32.totalorder %s35, 0
      %p359 = por %p357, %p358
      %s360 = ssub.s32 %s36, %s48
      %s361 = ssub.s32 %s37, %s44
      %s362 = sor.u32 %s360, %s361
      %p363 = scmp.eq.s32.totalorder %s362, 0
      %s365 = sadd.s32 %s364, 1
      %s366 = scalar_select %p363, %s364, %s365
      %p369 = pneg %p363
      %p370 = scmp.eq.s32.totalorder %s29, 1
      %p371 = por %p369, %p370
      %p372 = scmp.ne.s32.totalorder %s364, %s367
      %p373 = scmp.eq.s32.totalorder %s29, 0
      %p374 = por %p372, %p373
      %p375 = scmp.ne.s32.totalorder %s364, %s367
      %p376 = scmp.eq.s32.totalorder %s34, 1
      %p377 = por %p375, %p376
      %p378 = scmp.ne.s32.totalorder %s367, %s368
      %p379 = scmp.eq.s32.totalorder %s34, 0
      %p380 = por %p378, %p379
      %p381 = scmp.ne.s32.totalorder %s367, %s368
      %p382 = scmp.eq.s32.totalorder %s35, 1
      %p383 = por %p381, %p382
      %p385 = scmp.ne.s32.totalorder %s368, %s384
      %p386 = scmp.eq.s32.totalorder %s35, 0
      %p387 = por %p385, %p386
      %p388 = scmp.le.s32.totalorder 1, %s29
      %p389 = scmp.lt.s32.totalorder %s29, 3
      %p390 = pnand %p388, %p389
      %p391 = pneg %p390
      // Predicated region
      $region9: #{tpu_custom_call.1} parent=5 // pred_check
        _
      $region10: #{tpu_custom_call.1} parent=5 // pred_check_branch
        %393 = sbr.rel (%p390) target = $region12
      $region11: #{tpu_custom_call.1} parent=5 // pred_region
        %s394 = ssub.s32 %s29, 1
        // Predicated region
        $region13: #{tpu_custom_call.1} parent=11 // pred_check
          %p395 = pneg %p114
        $region14: #{tpu_custom_call.1} parent=11 // pred_check_branch
          %397 = sbr.rel (%p395) target = $region16
        $region15: #{tpu_custom_call.1} parent=11 // pred_region
          _
        $region16: #{tpu_custom_call.1} parent=11 // pred_fallthru
          _
        // Predicated region
        $region17: #{tpu_custom_call.1} parent=11 // pred_check
          %p398 = pneg %p135
        $region18: #{tpu_custom_call.1} parent=11 // pred_check_branch
          %400 = sbr.rel (%p398) target = $region20
        $region19: #{tpu_custom_call.1} parent=11 // pred_region
          _
        $region20: #{tpu_custom_call.1} parent=11 // pred_fallthru
          _
        // Predicated region
        $region21: #{tpu_custom_call.1} parent=11 // pred_check
          %p401 = pneg %p156
        $region22: #{tpu_custom_call.1} parent=11 // pred_check_branch
          %403 = sbr.rel (%p401) target = $region24
        $region23: #{tpu_custom_call.1} parent=11 // pred_region
          %s405 = ssub.s32 16, 16
          %406 = vsyncadd [#allocation4], %s405
          %s408 = sshll.u32 [#allocation3], 4
          %s409 = int_to_ptr.vmem [resolvable:$true] %s408
          %411 = dma.hbm_to_vmem [thread:$0]  %s4, 16, %s409, [#allocation4]
        $region24: #{tpu_custom_call.1} parent=11 // pred_fallthru
          _
        // Predicated region
        $region25: #{tpu_custom_call.1} parent=11 // pred_check
          %p412 = pneg %p177
        $region26: #{tpu_custom_call.1} parent=11 // pred_check_branch
          %414 = sbr.rel (%p412) target = $region28
        $region27: #{tpu_custom_call.1} parent=11 // pred_region
          _
        $region28: #{tpu_custom_call.1} parent=11 // pred_fallthru
          _
        // Predicated region
        $region29: #{tpu_custom_call.1} parent=11 // pred_check
          %p415 = pneg %p198
        $region30: #{tpu_custom_call.1} parent=11 // pred_check_branch
          %417 = sbr.rel (%p415) target = $region32
        $region31: #{tpu_custom_call.1} parent=11 // pred_region
          %s419 = ssub.s32 32, 32
          %420 = vsyncadd [#allocation7], %s419
          %s422 = sshll.u32 [#allocation6], 4
          %s423 = int_to_ptr.vmem [resolvable:$true] %s422
          %425 = dma.hbm_to_vmem [thread:$0]  %s6, 32, %s423, [#allocation7]
        $region32: #{tpu_custom_call.1} parent=11 // pred_fallthru
          _
        // Predicated region
        $region33: #{tpu_custom_call.1} parent=11 // pred_check
          %p426 = pneg %p219
        $region34: #{tpu_custom_call.1} parent=11 // pred_check_branch
          %428 = sbr.rel (%p426) target = $region36
        $region35: #{tpu_custom_call.1} parent=11 // pred_region
          _
        $region36: #{tpu_custom_call.1} parent=11 // pred_fallthru
          _
        // Predicated region
        $region37: #{tpu_custom_call.1} parent=11 // pred_check
          %p429 = pneg %p240
        $region38: #{tpu_custom_call.1} parent=11 // pred_check_branch
          %431 = sbr.rel (%p429) target = $region40
        $region39: #{tpu_custom_call.1} parent=11 // pred_region
          %s433 = ssub.s32 16, 16
          %434 = vsyncadd [#allocation7], %s433
          %s436 = sshll.u32 [#allocation8], 4
          %s437 = int_to_ptr.vmem [resolvable:$true] %s436
          %439 = dma.hbm_to_vmem [thread:$0]  %s8, 16, %s437, [#allocation7]
        $region40: #{tpu_custom_call.1} parent=11 // pred_fallthru
          _
        // Predicated region
        $region41: #{tpu_custom_call.1} parent=11 // pred_check
          %p440 = pneg %p261
        $region42: #{tpu_custom_call.1} parent=11 // pred_check_branch
          %442 = sbr.rel (%p440) target = $region44
        $region43: #{tpu_custom_call.1} parent=11 // pred_region
          _
        $region44: #{tpu_custom_call.1} parent=11 // pred_fallthru
          _
        // Predicated region
        $region45: #{tpu_custom_call.1} parent=11 // pred_check
          %p443 = pneg %p282
        $region46: #{tpu_custom_call.1} parent=11 // pred_check_branch
          %445 = sbr.rel (%p443) target = $region48
        $region47: #{tpu_custom_call.1} parent=11 // pred_region
          _
        $region48: #{tpu_custom_call.1} parent=11 // pred_fallthru
          _
        // Predicated region
        $region49: #{tpu_custom_call.1} parent=11 // pred_check
          %p446 = pneg %p303
        $region50: #{tpu_custom_call.1} parent=11 // pred_check_branch
          %448 = sbr.rel (%p446) target = $region52
        $region51: #{tpu_custom_call.1} parent=11 // pred_region
          _
        $region52: #{tpu_custom_call.1} parent=11 // pred_fallthru
          _
        // Predicated region
        $region53: #{tpu_custom_call.1} parent=11 // pred_check
          %p449 = pneg %p324
        $region54: #{tpu_custom_call.1} parent=11 // pred_check_branch
          %451 = sbr.rel (%p449) target = $region56
        $region55: #{tpu_custom_call.1} parent=11 // pred_region
          _
        $region56: #{tpu_custom_call.1} parent=11 // pred_fallthru
          _
      $region12: #{tpu_custom_call.1} parent=5 // pred_fallthru
        _
      %p452 = scmp.lt.s32.totalorder %s29, 2
      // Predicated region
      $region57: #{tpu_custom_call.1} parent=5 // pred_check
        %p453 = pneg %p452
      $region58: #{tpu_custom_call.1} parent=5 // pred_check_branch
        %455 = sbr.rel (%p453) target = $region60
      $region59: #{tpu_custom_call.1} parent=5 // pred_region
        // Predicated region
        $region61: #{tpu_custom_call.1} parent=59 // pred_check
          %p456 = pneg %p61
        $region62: #{tpu_custom_call.1} parent=59 // pred_check_branch
          %458 = sbr.rel (%p456) target = $region64
        $region63: #{tpu_custom_call.1} parent=59 // pred_region
          %p459 = scmp.lt.s32.totalorder %s36, 1
          %s460 = scalar_select %p459, %s36, 1
          %s461 = smul.addr %s460, 4
          %s462 = smul.addr %s461, 8
          %s463 = scalar_lea.vmem %s0, %s462
        $region64: #{tpu_custom_call.1} parent=59 // pred_fallthru
          _
        // Predicated region
        $region65: #{tpu_custom_call.1} parent=59 // pred_check
          %p464 = pneg %p87
        $region66: #{tpu_custom_call.1} parent=59 // pred_check_branch
          %466 = sbr.rel (%p464) target = $region68
        $region67: #{tpu_custom_call.1} parent=59 // pred_region
          %p467 = scmp.lt.s32.totalorder %s36, 1
          %s468 = scalar_select %p467, %s36, 1
          %s469 = scalar_lea.vmem %s1, %s468
        $region68: #{tpu_custom_call.1} parent=59 // pred_fallthru
          _
      $region60: #{tpu_custom_call.1} parent=5 // pred_fallthru
        _
      %p470 = scmp.le.s32.totalorder 1, %s29
      %p471 = scmp.lt.s32.totalorder %s29, 3
      %p472 = pnand %p470, %p471
      %p473 = pneg %p472
      // Predicated region
      $region69: #{tpu_custom_call.1} parent=5 // pred_check
        _
      $region70: #{tpu_custom_call.1} parent=5 // pred_check_branch
        %475 = sbr.rel (%p472) target = $region72
      $region71: #{tpu_custom_call.1} parent=5 // pred_region
        %s476 = ssub.s32 %s29, 1
        // Predicated region
        $region73: #{tpu_custom_call.1} parent=71 // pred_check
          %p477 = pneg %p156
        $region74: #{tpu_custom_call.1} parent=71 // pred_check_branch
          %479 = sbr.rel (%p477) target = $region76
        $region75: #{tpu_custom_call.1} parent=71 // pred_region
          %480 = dma.done [#allocation4], 16
        $region76: #{tpu_custom_call.1} parent=71 // pred_fallthru
          _
        // Predicated region
        $region77: #{tpu_custom_call.1} parent=71 // pred_check
          %p481 = pneg %p198
        $region78: #{tpu_custom_call.1} parent=71 // pred_check_branch
          %483 = sbr.rel (%p481) target = $region80
        $region79: #{tpu_custom_call.1} parent=71 // pred_region
          %484 = dma.done [#allocation7], 32
        $region80: #{tpu_custom_call.1} parent=71 // pred_fallthru
          _
        // Predicated region
        $region81: #{tpu_custom_call.1} parent=71 // pred_check
          %p485 = pneg %p240
        $region82: #{tpu_custom_call.1} parent=71 // pred_check_branch
          %487 = sbr.rel (%p485) target = $region84
        $region83: #{tpu_custom_call.1} parent=71 // pred_region
          %488 = dma.done [#allocation7], 16
        $region84: #{tpu_custom_call.1} parent=71 // pred_fallthru
          _
        %p489 = scmp.lt.s32.totalorder %s38, 1
        %s490 = scalar_select %p489, %s38, 1
        %s491 = smul.addr %s490, 4
        %s492 = smul.addr %s491, 8
        %s493 = scalar_lea.vmem %s0, %s492
        %p494 = pneg %p67
        %p495 = pneg %p64
        %p496 = scmp.lt.s32.totalorder %s38, 1
        %s497 = scalar_select %p496, %s38, 1
        %s498 = scalar_lea.vmem %s1, %s497
        %p499 = pneg %p93
        %p500 = pneg %p90
        %p501 = pneg %p114
        %p502 = pneg %p111
        %p503 = pneg %p135
        %p504 = pneg %p132
        %p505 = pneg %p156
        %p506 = pneg %p153
        %p507 = pneg %p177
        %p508 = pneg %p174
        %p509 = pneg %p198
        %p510 = pneg %p195
        %p511 = pneg %p219
        %p512 = pneg %p216
        %p513 = pneg %p240
        %p514 = pneg %p237
        %p515 = pneg %p261
        %p516 = pneg %p258
        %p517 = pneg %p282
        %p518 = pneg %p279
        %p519 = pneg %p303
        %p520 = pneg %p300
        %p521 = pneg %p324
        %p522 = pneg %p321
        %p523 = pneg %p352
        %p524 = pneg %p349
        %s525 = sand.u32 %s339, 1
        %s526 = scalar_lea.sflag [#allocation5], %s525
        %s527 = sand.u32 %s339, 1
        %s528 = smul.addr %s527, 32
        %s529 = scalar_lea.vmem [#allocation9], %s528
        %p530 = pneg %p380
        %p531 = pneg %p377
        %s532 = sand.u32 %s367, 1
        %s533 = scalar_lea.sflag [#allocation11], %s532
        %s534 = sand.u32 %s367, 1
        %s535 = smul.addr %s534, 64
        %s536 = scalar_lea.vmem [#allocation10], %s535
        %p537 = scmp.lt.s32.totalorder %s38, 1
        %s538 = scalar_select %p537, %s38, 1
        %s539 = smul.addr %s538, 4
        %s540 = smul.addr %s539, 8
        %s541 = scalar_lea.vmem %s0, %s540
        %p542 = scmp.lt.s32.totalorder %s38, 1
        %s543 = scalar_select %p542, %s38, 1
        %s544 = scalar_lea.vmem %s1, %s543
        %s545 = smul.u32 4, %s39
        %s546 = smul.u32 4, %s39
        %v548 = vld [vmem:[#allocation3] sm:$0x1]
        %v549 = vld [vmem:[%s544] sm:$0x1]
        %v550 = vld [vmem:[%s2] sm:$0xff]
        %v551 = vld [vmem:[%s2 + $0x8] sm:$0xff]
        %v552 = vld [vmem:[%s2 + $0x10] sm:$0xff]
        %v553 = vld [vmem:[%s2 + $0x18] sm:$0xff]
        %v554 = vld [vmem:[%s3] sm:$0xff]
        %v555 = vld [vmem:[%s3 + $0x8] sm:$0xff]
        %v556 = vld [vmem:[%s3 + $0x10] sm:$0xff]
        %v557 = vld [vmem:[%s3 + $0x18] sm:$0xff]
        %s558 = smul.u32 %s39, 32
        %s559 = scalar_lea.vmem %s541, %s558
        %v560 = vld [vmem:[%s559] sm:$0xff]
        %v561 = vld [vmem:[%s559 + $0x8] sm:$0xff]
        %v562 = vld [vmem:[%s559 + $0x10] sm:$0xff]
        %v563 = vld [vmem:[%s559 + $0x18] sm:$0xff]
        %v564 = vmul.f32 %v560, %v560
        %v565 = vmul.f32 %v561, %v561
        %v566 = vmul.f32 %v562, %v562
        %v567 = vmul.f32 %v563, %v563
        %vm568 = vcmask 523264
        %v569 = vsel %vm568, %v564, 0.0
        %570 = vadd.xlane.f32.xlu0 %v569
        %v571 = vpop.xlane.xlu0 %570
        %v572 = vsel %vm568, %v565, 0.0
        %573 = vadd.xlane.f32.xlu0 %v572
        %v574 = vpop.xlane.xlu0 %573
        %v575 = vsel %vm568, %v566, 0.0
        %576 = vadd.xlane.f32.xlu0 %v575
        %v577 = vpop.xlane.xlu0 %576
        %v578 = vsel %vm568, %v567, 0.0
        %579 = vadd.xlane.f32.xlu0 %v578
        %v580 = vpop.xlane.xlu0 %579
        %v581 = vrcp.pop 64.0
        %v582 = vmul.f32 %v571, %v581
        %v583 = vmul.f32 %v574, %v581
        %v584 = vmul.f32 %v577, %v581
        %v585 = vmul.f32 %v580, %v581
        %v586 = vadd.f32 %v582, 1e-06
        %v587 = vadd.f32 %v583, 1e-06
        %v588 = vadd.f32 %v584, 1e-06
        %v589 = vadd.f32 %v585, 1e-06
        %v590 = vrsqrt.pop %v586
        %v591 = vrsqrt.pop %v587
        %v592 = vrsqrt.pop %v588
        %v593 = vrsqrt.pop %v589
        %v594 = vmul.f32 %v560, %v590
        %v595 = vmul.f32 %v561, %v591
        %v596 = vmul.f32 %v562, %v592
        %v597 = vmul.f32 %v563, %v593
        %v599 = vlaneseq
        %v600 = vshrl.u32 %v599, 7
        %v601 = vsub.s32 0, %v600
        %v602 = vrot.slane %v548, %v601
        %v604 = vmul.f32 %v594, %v602
        %v605 = vmul.f32 %v595, %v602
        %v606 = vmul.f32 %v596, %v602
        %v607 = vmul.f32 %v597, %v602
        %v608 = vpack.c.bf16 %v605, %v604
        %v609 = vpack.c.bf16 %v607, %v606
        %v610 = vld [vmem:[%s5] sm:$0xff]
        %v611 = vld [vmem:[%s5 + $0x8] sm:$0xff]
        %v612 = vld [vmem:[%s5 + $0x10] sm:$0xff]
        %v613 = vld [vmem:[%s5 + $0x18] sm:$0xff]
        %v614 = vld [vmem:[%s5 + $0x20] sm:$0xff]
        %v615 = vld [vmem:[%s5 + $0x28] sm:$0xff]
        %v616 = vld [vmem:[%s5 + $0x30] sm:$0xff]
        %v617 = vld [vmem:[%s5 + $0x38] sm:$0xff]
        %v618 = vld [vmem:[#allocation6] sm:$0x3]
        %v620 = vlaneseq
        %v621 = vshrl.u32 %v620, 7
        %v622 = vsub.s32 0, %v621
        %v623 = vrot.slane %v618, %v622
        %v624 = vlaneseq
        %v625 = vshrl.u32 %v624, 7
        %v626 = vsub.s32 1, %v625
        %v627 = vrot.slane %v618, %v626
        %v638 = vunpack.c.l.b16 %v610
        %v639 = vunpack.c.h.b16 %v610
        %v640 = vunpack.c.l.b16 %v611
        %v641 = vunpack.c.h.b16 %v611
        %v642 = vunpack.c.l.b16 %v612
        %v643 = vunpack.c.h.b16 %v612
        %v644 = vunpack.c.l.b16 %v613
        %v645 = vunpack.c.h.b16 %v613
        %v646 = vunpack.c.l.b16 %v614
        %v647 = vunpack.c.h.b16 %v614
        %v648 = vunpack.c.l.b16 %v615
        %v649 = vunpack.c.h.b16 %v615
        %v650 = vunpack.c.l.b16 %v616
        %v651 = vunpack.c.h.b16 %v616
        %v652 = vunpack.c.l.b16 %v617
        %v653 = vunpack.c.h.b16 %v617
        %v654 = vpack.c.b16 %v640, %v638
        %v655 = vpack.c.b16 %v641, %v639
        %v656 = vpack.c.b16 %v644, %v642
        %v657 = vpack.c.b16 %v645, %v643
        %v658 = vpack.c.b16 %v648, %v646
        %v659 = vpack.c.b16 %v649, %v647
        %v660 = vpack.c.b16 %v652, %v650
        %v661 = vpack.c.b16 %v653, %v651
        %v671 = vsel %vm568, %v608, 0
        %v674 = vsel %vm568, %v609, 0
        %676 = vmatprep.subr.bf16.mxu0 %v655
        %677 = vmatpush1.bf16.msra.mxu0 %v654
        %678 = vmatprep.subr.bf16.mxu0 %v657
        %679 = vmatpush1.bf16.msra.mxu0 %v656
        %680 = vmatprep.subr.bf16.mxu0 %v659
        %681 = vmatpush1.bf16.msra.mxu0 %v658
        %682 = vmatprep.subr.bf16.mxu0 %v661
        %683 = vmatpush1.bf16.msra.mxu0 %v660
        %684 = vmatprep.subr.bf16.mxu0 0
        %685 = vmatpush1.bf16.msra.mxu0 0
        %686 = vmatprep.subr.bf16.mxu0 0
        %687 = vmatpush1.bf16.msra.mxu0 0
        %688 = vmatprep.subr.bf16.mxu0 0
        %689 = vmatpush1.bf16.msra.mxu0 0
        %690 = vmatprep.subr.bf16.mxu0 0
        %691 = vmatpush1.bf16.msra.mxu0 0
        %692 = vmatprep.subr.bf16.mxu0 0
        %693 = vmatpush1.bf16.msra.mxu0 0
        %694 = vmatprep.subr.bf16.mxu0 0
        %695 = vmatpush1.bf16.msra.mxu0 0
        %696 = vmatprep.subr.bf16.mxu0 0
        %697 = vmatpush1.bf16.msra.mxu0 0
        %698 = vmatprep.subr.bf16.mxu0 0
        %699 = vmatpush1.bf16.msra.mxu0 0
        %700 = vmatprep.subr.bf16.mxu0 0
        %701 = vmatpush1.bf16.msra.mxu0 0
        %702 = vmatprep.subr.bf16.mxu0 0
        %703 = vmatpush1.bf16.msra.mxu0 0
        %704 = vmatprep.subr.bf16.mxu0 0
        %705 = vmatpush1.bf16.msra.mxu0 0
        %706 = vmatprep.subr.bf16.mxu0 0
        %707 = vmatpush1.bf16.msra.mxu0 0
        %708 = vmatprep.mubr.bf16.mxu0 0
        %709 = vmatmul.mubr.bf16.gmra.mrb[0].mxu0 %v671
        %v710 = vpop.f32.mrb[0].mxu0
        %v711 = vadd.f32 %v623, %v710
        %v712 = vpop.f32.mrb[0].mxu0
        %v713 = vadd.f32 %v627, %v712
        %v714 = vpop.f32.mrb[0].mxu0
        %v715 = vadd.f32 %v623, %v714
        %v716 = vpop.f32.mrb[0].mxu0
        %v717 = vadd.f32 %v627, %v716
        %718 = vmatprep.mubr.bf16.mxu0 0
        %719 = vmatmul.mubr.bf16.gmra.mrb[0].mxu0 %v674
        %v720 = vpop.f32.mrb[0].mxu0
        %v721 = vadd.f32 %v623, %v720
        %v722 = vpop.f32.mrb[0].mxu0
        %v723 = vadd.f32 %v627, %v722
        %v724 = vpop.f32.mrb[0].mxu0
        %v725 = vadd.f32 %v623, %v724
        %v726 = vpop.f32.mrb[0].mxu0
        %v727 = vadd.f32 %v627, %v726
        %728 = vdwg.mxu0
        %v729 = vmul.f32 %v713, 0.25
        %v730 = vmul.f32 %v717, 0.25
        %v731 = vmul.f32 %v723, 0.25
        %v732 = vmul.f32 %v727, 0.25
        %v733 = vmul.f32 %v729, %v550
        %v734 = vmul.f32 %v730, %v551
        %v735 = vmul.f32 %v731, %v552
        %v736 = vmul.f32 %v732, %v553
        %741 = vrot.lane.b32.xlu0 %v729, 120
        %v742 = vpop.permute.xlu0 %741
        %743 = vrot.lane.b32.xlu0 %v730, 120
        %v744 = vpop.permute.xlu0 %743
        %745 = vrot.lane.b32.xlu0 %v731, 120
        %v746 = vpop.permute.xlu0 %745
        %747 = vrot.lane.b32.xlu0 %v732, 120
        %v748 = vpop.permute.xlu0 %747
        %753 = vrot.lane.b32.xlu0 %v729, 8
        %v754 = vpop.permute.xlu0 %753
        %755 = vrot.lane.b32.xlu0 %v730, 8
        %v756 = vpop.permute.xlu0 %755
        %757 = vrot.lane.b32.xlu0 %v731, 8
        %v758 = vpop.permute.xlu0 %757
        %759 = vrot.lane.b32.xlu0 %v732, 8
        %v760 = vpop.permute.xlu0 %759
        %vm765 = vcmask 64512
        %v766 = vsel %vm765, %v742, %v754
        %v767 = vsel %vm765, %v744, %v756
        %v768 = vsel %vm765, %v746, %v758
        %v769 = vsel %vm765, %v748, %v760
        %v770 = vmul.f32 %v766, %v554
        %v771 = vmul.f32 %v767, %v555
        %v772 = vmul.f32 %v768, %v556
        %v773 = vmul.f32 %v769, %v557
        %v774 = vadd.f32 %v733, %v770
        %v775 = vadd.f32 %v734, %v771
        %v776 = vadd.f32 %v735, %v772
        %v777 = vadd.f32 %v736, %v773
        %v778 = vpack.c.bf16 %v775, %v774
        %v779 = vpack.c.bf16 %v777, %v776
        %v780 = vmul.f32 %v711, %v550
        %v781 = vmul.f32 %v715, %v551
        %v782 = vmul.f32 %v721, %v552
        %v783 = vmul.f32 %v725, %v553
        %788 = vrot.lane.b32.xlu0 %v711, 120
        %v789 = vpop.permute.xlu0 %788
        %790 = vrot.lane.b32.xlu0 %v715, 120
        %v791 = vpop.permute.xlu0 %790
        %792 = vrot.lane.b32.xlu0 %v721, 120
        %v793 = vpop.permute.xlu0 %792
        %794 = vrot.lane.b32.xlu0 %v725, 120
        %v795 = vpop.permute.xlu0 %794
        %800 = vrot.lane.b32.xlu0 %v711, 8
        %v801 = vpop.permute.xlu0 %800
        %802 = vrot.lane.b32.xlu0 %v715, 8
        %v803 = vpop.permute.xlu0 %802
        %804 = vrot.lane.b32.xlu0 %v721, 8
        %v805 = vpop.permute.xlu0 %804
        %806 = vrot.lane.b32.xlu0 %v725, 8
        %v807 = vpop.permute.xlu0 %806
        %v812 = vsel %vm765, %v789, %v801
        %v813 = vsel %vm765, %v791, %v803
        %v814 = vsel %vm765, %v793, %v805
        %v815 = vsel %vm765, %v795, %v807
        %v816 = vmul.f32 %v812, %v554
        %v817 = vmul.f32 %v813, %v555
        %v818 = vmul.f32 %v814, %v556
        %v819 = vmul.f32 %v815, %v557
        %v820 = vadd.f32 %v780, %v816
        %v821 = vadd.f32 %v781, %v817
        %v822 = vadd.f32 %v782, %v818
        %v823 = vadd.f32 %v783, %v819
        %v824 = vpack.c.bf16 %v821, %v820
        %v825 = vpack.c.bf16 %v823, %v822
        %v826 = vpack.c.bf16 %v715, %v711
        %v827 = vpack.c.bf16 %v725, %v721
        %v829 = vlaneseq
        %v830 = vshrl.u32 %v829, 7
        %v831 = vsub.s32 0, %v830
        %v832 = vrot.slane %v549, %v831
        %vm834 = vcmask 130048
        %v836 = vsel %vm834, %v778, 0
        %v839 = vsel %vm834, %v779, 0
        %v842 = vsel %vm834, %v824, 0
        %v845 = vsel %vm834, %v825, 0
        %847 = vmatprep.subr.bf16.mxu0 0
        %848 = vmatpush1.bf16.xpose.msra.mxu0 %v842
        %849 = vmatprep.subr.bf16.mxu0 0
        %850 = vmatpush1.bf16.xpose.msra.mxu0 %v845
        %851 = vmatprep.subr.bf16.mxu0 0
        %852 = vmatpush1.bf16.xpose.msra.mxu0 0
        %853 = vmatprep.subr.bf16.mxu0 0
        %854 = vmatpush1.bf16.xpose.msra.mxu0 0
        %855 = vmatprep.subr.bf16.mxu0 0
        %856 = vmatpush1.bf16.xpose.msra.mxu0 0
        %857 = vmatprep.subr.bf16.mxu0 0
        %858 = vmatpush1.bf16.xpose.msra.mxu0 0
        %859 = vmatprep.subr.bf16.mxu0 0
        %860 = vmatpush1.bf16.xpose.msra.mxu0 0
        %861 = vmatprep.subr.bf16.mxu0 0
        %862 = vmatpush1.bf16.xpose.msra.mxu0 0
        %863 = vmatprep.subr.bf16.mxu0 0
        %864 = vmatpush1.bf16.xpose.msra.mxu0 0
        %865 = vmatprep.subr.bf16.mxu0 0
        %866 = vmatpush1.bf16.xpose.msra.mxu0 0
        %867 = vmatprep.subr.bf16.mxu0 0
        %868 = vmatpush1.bf16.xpose.msra.mxu0 0
        %869 = vmatprep.subr.bf16.mxu0 0
        %870 = vmatpush1.bf16.xpose.msra.mxu0 0
        %871 = vmatprep.subr.bf16.mxu0 0
        %872 = vmatpush1.bf16.xpose.msra.mxu0 0
        %873 = vmatprep.subr.bf16.mxu0 0
        %874 = vmatpush1.bf16.xpose.msra.mxu0 0
        %875 = vmatprep.subr.bf16.mxu0 0
        %876 = vmatpush1.bf16.xpose.msra.mxu0 0
        %877 = vmatprep.subr.bf16.mxu0 0
        %878 = vmatpush1.bf16.xpose.msra.mxu0 0
        %879 = vmatprep.mubr.bf16.mxu0 0
        %880 = vmatmul.mubr.bf16.gmra.mrb[0].mxu0 %v836
        %v881 = vpop.f32.mrb[0].mxu0
        %v882 = vadd.f32 %v832, %v881
        %v883 = vpop.f32.mrb[0].mxu0
        %v884 = vpop.f32.mrb[0].mxu0
        %v885 = vadd.f32 %v832, %v884
        %v886 = vpop.f32.mrb[0].mxu0
        %887 = vmatprep.mubr.bf16.mxu0 0
        %888 = vmatmul.mubr.bf16.gmra.mrb[0].mxu0 %v839
        %v889 = vpop.f32.mrb[0].mxu0
        %v890 = vadd.f32 %v832, %v889
        %v891 = vpop.f32.mrb[0].mxu0
        %v892 = vpop.f32.mrb[0].mxu0
        %v893 = vadd.f32 %v832, %v892
        %v894 = vpop.f32.mrb[0].mxu0
        %895 = vdwg.mxu0
        %vm896 = vcmask 261120
        %v897 = vsel %vm896, %v882, -inf
        %898 = vmax.xlane.f32.xlu0 %v897
        %v899 = vpop.xlane.xlu0 %898
        %v900 = vsel %vm896, %v885, -inf
        %901 = vmax.xlane.f32.xlu0 %v900
        %v902 = vpop.xlane.xlu0 %901
        %v903 = vsel %vm896, %v890, -inf
        %904 = vmax.xlane.f32.xlu0 %v903
        %v905 = vpop.xlane.xlu0 %904
        %v906 = vsel %vm896, %v893, -inf
        %907 = vmax.xlane.f32.xlu0 %v906
        %v908 = vpop.xlane.xlu0 %907
        %v909 = vsub.f32 %v882, %v899
        %v910 = vsub.f32 %v885, %v902
        %v911 = vsub.f32 %v890, %v905
        %v912 = vsub.f32 %v893, %v908
        %v913 = vmul.f32 %v909, 1.442695
        %v914 = vpow.pop %v913
        %v915 = vmul.f32 %v910, 1.442695
        %v916 = vpow.pop %v915
        %v917 = vmul.f32 %v911, 1.442695
        %v918 = vpow.pop %v917
        %v919 = vmul.f32 %v912, 1.442695
        %v920 = vpow.pop %v919
        %v921 = vsel %vm896, %v914, 0.0
        %922 = vadd.xlane.f32.xlu0 %v921
        %v923 = vpop.xlane.xlu0 %922
        %v924 = vsel %vm896, %v916, 0.0
        %925 = vadd.xlane.f32.xlu0 %v924
        %v926 = vpop.xlane.xlu0 %925
        %v927 = vsel %vm896, %v918, 0.0
        %928 = vadd.xlane.f32.xlu0 %v927
        %v929 = vpop.xlane.xlu0 %928
        %v930 = vsel %vm896, %v920, 0.0
        %931 = vadd.xlane.f32.xlu0 %v930
        %v932 = vpop.xlane.xlu0 %931
        %v933 = vrcp.pop %v923
        %v934 = vrcp.pop %v926
        %v935 = vrcp.pop %v929
        %v936 = vrcp.pop %v932
        %v937 = vmul.f32 %v914, %v933
        %v938 = vmul.f32 %v916, %v934
        %v939 = vmul.f32 %v918, %v935
        %v940 = vmul.f32 %v920, %v936
        %v941 = vpack.c.bf16 %v938, %v937
        %v942 = vpack.c.bf16 %v940, %v939
        %v945 = vunpack.c.l.b16 %v941
        %v946 = vunpack.c.h.b16 %v941
        %v947 = vunpack.c.l.b16 %v942
        %v948 = vunpack.c.h.b16 %v942
        %v949 = vpack.c.b16 %v945, %v945
        %v950 = vpack.c.b16 %v946, %v946
        %v951 = vpack.c.b16 %v947, %v947
        %v952 = vpack.c.b16 %v948, %v948
        %vm957 = vcmask 257024
        %958 = vst.msk [vmem:[%s536] sm:$0xf] %vm957, %v949
        %959 = vst.msk [vmem:[%s536 + $0x4] sm:$0xf] %vm957, %v950
        %960 = vst.msk [vmem:[%s536 + $0x8] sm:$0xf] %vm957, %v951
        %961 = vst.msk [vmem:[%s536 + $0xc] sm:$0xf] %vm957, %v952
        %964 = vrot.lane.b32.xlu0 %v826, 64
        %v965 = vpop.permute.xlu0 %964
        %966 = vrot.lane.b32.xlu0 %v827, 64
        %v967 = vpop.permute.xlu0 %966
        %v971 = vsel %vm896, %v941, 0
        %v974 = vsel %vm896, %v942, 0
        %976 = vmatprep.subr.bf16.mxu0 0
        %977 = vmatpush1.bf16.msra.mxu0 %v965
        %978 = vmatprep.subr.bf16.mxu0 0
        %979 = vmatpush1.bf16.msra.mxu0 %v967
        %980 = vmatprep.subr.bf16.mxu0 0
        %981 = vmatpush1.bf16.msra.mxu0 0
        %982 = vmatprep.subr.bf16.mxu0 0
        %983 = vmatpush1.bf16.msra.mxu0 0
        %984 = vmatprep.subr.bf16.mxu0 0
        %985 = vmatpush1.bf16.msra.mxu0 0
        %986 = vmatprep.subr.bf16.mxu0 0
        %987 = vmatpush1.bf16.msra.mxu0 0
        %988 = vmatprep.subr.bf16.mxu0 0
        %989 = vmatpush1.bf16.msra.mxu0 0
        %990 = vmatprep.subr.bf16.mxu0 0
        %991 = vmatpush1.bf16.msra.mxu0 0
        %992 = vmatprep.subr.bf16.mxu0 0
        %993 = vmatpush1.bf16.msra.mxu0 0
        %994 = vmatprep.subr.bf16.mxu0 0
        %995 = vmatpush1.bf16.msra.mxu0 0
        %996 = vmatprep.subr.bf16.mxu0 0
        %997 = vmatpush1.bf16.msra.mxu0 0
        %998 = vmatprep.subr.bf16.mxu0 0
        %999 = vmatpush1.bf16.msra.mxu0 0
        %1000 = vmatprep.subr.bf16.mxu0 0
        %1001 = vmatpush1.bf16.msra.mxu0 0
        %1002 = vmatprep.subr.bf16.mxu0 0
        %1003 = vmatpush1.bf16.msra.mxu0 0
        %1004 = vmatprep.subr.bf16.mxu0 0
        %1005 = vmatpush1.bf16.msra.mxu0 0
        %1006 = vmatprep.subr.bf16.mxu0 0
        %1007 = vmatpush1.bf16.msra.mxu0 0
        %1008 = vmatprep.mubr.bf16.mxu0 0
        %1009 = vmatmul.mubr.bf16.gmra.mrb[0].mxu0 %v971
        %v1010 = vpop.f32.mrb[0].mxu0
        %v1011 = vadd.f32 0.0, %v1010
        %v1012 = vpop.f32.mrb[0].mxu0
        %v1013 = vpop.f32.mrb[0].mxu0
        %v1014 = vadd.f32 0.0, %v1013
        %v1015 = vpop.f32.mrb[0].mxu0
        %1016 = vmatprep.mubr.bf16.mxu0 0
        %1017 = vmatmul.mubr.bf16.gmra.mrb[0].mxu0 %v974
        %v1018 = vpop.f32.mrb[0].mxu0
        %v1019 = vadd.f32 0.0, %v1018
        %v1020 = vpop.f32.mrb[0].mxu0
        %v1021 = vpop.f32.mrb[0].mxu0
        %v1022 = vadd.f32 0.0, %v1021
        %v1023 = vpop.f32.mrb[0].mxu0
        %1024 = vdwg.mxu0
        %v1025 = vpack.c.bf16 %v1014, %v1011
        %v1026 = vpack.c.bf16 %v1022, %v1019
        %1027 = vst.msk [vmem:[#allocation2] sm:$0xff] %vm834, %v1025
        %1028 = vst.msk [vmem:[#allocation2 + $0x8] sm:$0xff] %vm834, %v1026
        %1033 = vrot.lane.b32.xlu0 %v550, 16
        %v1034 = vpop.permute.xlu0 %1033
        %1035 = vrot.lane.b32.xlu0 %v551, 16
        %v1036 = vpop.permute.xlu0 %1035
        %1037 = vrot.lane.b32.xlu0 %v552, 16
        %v1038 = vpop.permute.xlu0 %1037
        %1039 = vrot.lane.b32.xlu0 %v553, 16
        %v1040 = vpop.permute.xlu0 %1039
        %v1045 = vmul.f32 %v729, %v1034
        %v1046 = vmul.f32 %v730, %v1036
        %v1047 = vmul.f32 %v731, %v1038
        %v1048 = vmul.f32 %v732, %v1040
        %1049 = vrot.lane.b32.xlu0 %v729, 104
        %v1050 = vpop.permute.xlu0 %1049
        %1051 = vrot.lane.b32.xlu0 %v730, 104
        %v1052 = vpop.permute.xlu0 %1051
        %1053 = vrot.lane.b32.xlu0 %v731, 104
        %v1054 = vpop.permute.xlu0 %1053
        %1055 = vrot.lane.b32.xlu0 %v732, 104
        %v1056 = vpop.permute.xlu0 %1055
        %v1061 = vsel %vm765, %v1050, %v742
        %v1062 = vsel %vm765, %v1052, %v744
        %v1063 = vsel %vm765, %v1054, %v746
        %v1064 = vsel %vm765, %v1056, %v748
        %v1065 = vmul.f32 %v1061, %v554
        %v1066 = vmul.f32 %v1062, %v555
        %v1067 = vmul.f32 %v1063, %v556
        %v1068 = vmul.f32 %v1064, %v557
        %1073 = vrot.lane.b32.xlu0 %v1065, 16
        %v1074 = vpop.permute.xlu0 %1073
        %1075 = vrot.lane.b32.xlu0 %v1066, 16
        %v1076 = vpop.permute.xlu0 %1075
        %1077 = vrot.lane.b32.xlu0 %v1067, 16
        %v1078 = vpop.permute.xlu0 %1077
        %1079 = vrot.lane.b32.xlu0 %v1068, 16
        %v1080 = vpop.permute.xlu0 %1079
        %v1085 = vadd.f32 %v1045, %v1074
        %v1086 = vadd.f32 %v1046, %v1076
        %v1087 = vadd.f32 %v1047, %v1078
        %v1088 = vadd.f32 %v1048, %v1080
        %v1089 = vpack.c.bf16 %v1086, %v1085
        %v1090 = vpack.c.bf16 %v1088, %v1087
        %v1091 = vmul.f32 %v711, %v1034
        %v1092 = vmul.f32 %v715, %v1036
        %v1093 = vmul.f32 %v721, %v1038
        %v1094 = vmul.f32 %v725, %v1040
        %1095 = vrot.lane.b32.xlu0 %v711, 104
        %v1096 = vpop.permute.xlu0 %1095
        %1097 = vrot.lane.b32.xlu0 %v715, 104
        %v1098 = vpop.permute.xlu0 %1097
        %1099 = vrot.lane.b32.xlu0 %v721, 104
        %v1100 = vpop.permute.xlu0 %1099
        %1101 = vrot.lane.b32.xlu0 %v725, 104
        %v1102 = vpop.permute.xlu0 %1101
        %v1107 = vsel %vm765, %v1096, %v789
        %v1108 = vsel %vm765, %v1098, %v791
        %v1109 = vsel %vm765, %v1100, %v793
        %v1110 = vsel %vm765, %v1102, %v795
        %v1111 = vmul.f32 %v1107, %v554
        %v1112 = vmul.f32 %v1108, %v555
        %v1113 = vmul.f32 %v1109, %v556
        %v1114 = vmul.f32 %v1110, %v557
        %1119 = vrot.lane.b32.xlu0 %v1111, 16
        %v1120 = vpop.permute.xlu0 %1119
        %1121 = vrot.lane.b32.xlu0 %v1112, 16
        %v1122 = vpop.permute.xlu0 %1121
        %1123 = vrot.lane.b32.xlu0 %v1113, 16
        %v1124 = vpop.permute.xlu0 %1123
        %1125 = vrot.lane.b32.xlu0 %v1114, 16
        %v1126 = vpop.permute.xlu0 %1125
        %v1131 = vadd.f32 %v1091, %v1120
        %v1132 = vadd.f32 %v1092, %v1122
        %v1133 = vadd.f32 %v1093, %v1124
        %v1134 = vadd.f32 %v1094, %v1126
        %v1135 = vpack.c.bf16 %v1132, %v1131
        %v1136 = vpack.c.bf16 %v1134, %v1133
        %1139 = vrot.lane.b32.xlu0 %v1089, 112
        %v1140 = vpop.permute.xlu0 %1139
        %1141 = vrot.lane.b32.xlu0 %v1090, 112
        %v1142 = vpop.permute.xlu0 %1141
        %1145 = vrot.lane.b32.xlu0 %v1135, 112
        %v1146 = vpop.permute.xlu0 %1145
        %1147 = vrot.lane.b32.xlu0 %v1136, 112
        %v1148 = vpop.permute.xlu0 %1147
        %v1150 = vsel %vm834, %v1140, 0
        %v1153 = vsel %vm834, %v1142, 0
        %v1156 = vsel %vm834, %v1146, 0
        %v1159 = vsel %vm834, %v1148, 0
        %1161 = vmatprep.subr.bf16.mxu0 0
        %1162 = vmatpush1.bf16.xpose.msra.mxu0 %v1156
        %1163 = vmatprep.subr.bf16.mxu0 0
        %1164 = vmatpush1.bf16.xpose.msra.mxu0 %v1159
        %1165 = vmatprep.subr.bf16.mxu0 0
        %1166 = vmatpush1.bf16.xpose.msra.mxu0 0
        %1167 = vmatprep.subr.bf16.mxu0 0
        %1168 = vmatpush1.bf16.xpose.msra.mxu0 0
        %1169 = vmatprep.subr.bf16.mxu0 0
        %1170 = vmatpush1.bf16.xpose.msra.mxu0 0
        %1171 = vmatprep.subr.bf16.mxu0 0
        %1172 = vmatpush1.bf16.xpose.msra.mxu0 0
        %1173 = vmatprep.subr.bf16.mxu0 0
        %1174 = vmatpush1.bf16.xpose.msra.mxu0 0
        %1175 = vmatprep.subr.bf16.mxu0 0
        %1176 = vmatpush1.bf16.xpose.msra.mxu0 0
        %1177 = vmatprep.subr.bf16.mxu0 0
        %1178 = vmatpush1.bf16.xpose.msra.mxu0 0
        %1179 = vmatprep.subr.bf16.mxu0 0
        %1180 = vmatpush1.bf16.xpose.msra.mxu0 0
        %1181 = vmatprep.subr.bf16.mxu0 0
        %1182 = vmatpush1.bf16.xpose.msra.mxu0 0
        %1183 = vmatprep.subr.bf16.mxu0 0
        %1184 = vmatpush1.bf16.xpose.msra.mxu0 0
        %1185 = vmatprep.subr.bf16.mxu0 0
        %1186 = vmatpush1.bf16.xpose.msra.mxu0 0
        %1187 = vmatprep.subr.bf16.mxu0 0
        %1188 = vmatpush1.bf16.xpose.msra.mxu0 0
        %1189 = vmatprep.subr.bf16.mxu0 0
        %1190 = vmatpush1.bf16.xpose.msra.mxu0 0
        %1191 = vmatprep.subr.bf16.mxu0 0
        %1192 = vmatpush1.bf16.xpose.msra.mxu0 0
        %1193 = vmatprep.mubr.bf16.mxu0 0
        %1194 = vmatmul.mubr.bf16.gmra.mrb[0].mxu0 %v1150
        %v1195 = vpop.f32.mrb[0].mxu0
        %v1196 = vadd.f32 %v832, %v1195
        %v1197 = vpop.f32.mrb[0].mxu0
        %v1198 = vpop.f32.mrb[0].mxu0
        %v1199 = vadd.f32 %v832, %v1198
        %v1200 = vpop.f32.mrb[0].mxu0
        %1201 = vmatprep.mubr.bf16.mxu0 0
        %1202 = vmatmul.mubr.bf16.gmra.mrb[0].mxu0 %v1153
        %v1203 = vpop.f32.mrb[0].mxu0
        %v1204 = vadd.f32 %v832, %v1203
        %v1205 = vpop.f32.mrb[0].mxu0
        %v1206 = vpop.f32.mrb[0].mxu0
        %v1207 = vadd.f32 %v832, %v1206
        %v1208 = vpop.f32.mrb[0].mxu0
        %1209 = vdwg.mxu0
        %v1210 = vsel %vm896, %v1196, -inf
        %1211 = vmax.xlane.f32.xlu0 %v1210
        %v1212 = vpop.xlane.xlu0 %1211
        %v1213 = vsel %vm896, %v1199, -inf
        %1214 = vmax.xlane.f32.xlu0 %v1213
        %v1215 = vpop.xlane.xlu0 %1214
        %v1216 = vsel %vm896, %v1204, -inf
        %1217 = vmax.xlane.f32.xlu0 %v1216
        %v1218 = vpop.xlane.xlu0 %1217
        %v1219 = vsel %vm896, %v1207, -inf
        %1220 = vmax.xlane.f32.xlu0 %v1219
        %v1221 = vpop.xlane.xlu0 %1220
        %v1222 = vsub.f32 %v1196, %v1212
        %v1223 = vsub.f32 %v1199, %v1215
        %v1224 = vsub.f32 %v1204, %v1218
        %v1225 = vsub.f32 %v1207, %v1221
        %v1226 = vmul.f32 %v1222, 1.442695
        %v1227 = vpow.pop %v1226
        %v1228 = vmul.f32 %v1223, 1.442695
        %v1229 = vpow.pop %v1228
        %v1230 = vmul.f32 %v1224, 1.442695
        %v1231 = vpow.pop %v1230
        %v1232 = vmul.f32 %v1225, 1.442695
        %v1233 = vpow.pop %v1232
        %v1234 = vsel %vm896, %v1227, 0.0
        %1235 = vadd.xlane.f32.xlu0 %v1234
        %v1236 = vpop.xlane.xlu0 %1235
        %v1237 = vsel %vm896, %v1229, 0.0
        %1238 = vadd.xlane.f32.xlu0 %v1237
        %v1239 = vpop.xlane.xlu0 %1238
        %v1240 = vsel %vm896, %v1231, 0.0
        %1241 = vadd.xlane.f32.xlu0 %v1240
        %v1242 = vpop.xlane.xlu0 %1241
        %v1243 = vsel %vm896, %v1233, 0.0
        %1244 = vadd.xlane.f32.xlu0 %v1243
        %v1245 = vpop.xlane.xlu0 %1244
        %v1246 = vrcp.pop %v1236
        %v1247 = vrcp.pop %v1239
        %v1248 = vrcp.pop %v1242
        %v1249 = vrcp.pop %v1245
        %v1250 = vmul.f32 %v1227, %v1246
        %v1251 = vmul.f32 %v1229, %v1247
        %v1252 = vmul.f32 %v1231, %v1248
        %v1253 = vmul.f32 %v1233, %v1249
        %v1254 = vpack.c.bf16 %v1251, %v1250
        %v1255 = vpack.c.bf16 %v1253, %v1252
        %v1258 = vunpack.c.l.b16 %v1254
        %v1259 = vunpack.c.h.b16 %v1254
        %v1260 = vunpack.c.l.b16 %v1255
        %v1261 = vunpack.c.h.b16 %v1255
        %v1262 = vpack.c.b16 %v1258, %v1258
        %v1263 = vpack.c.b16 %v1259, %v1259
        %v1264 = vpack.c.b16 %v1260, %v1260
        %v1265 = vpack.c.b16 %v1261, %v1261
        %s1270 = scalar_lea.vmem %s536, 16 [#allocation10]
        %1271 = vst.msk [vmem:[%s1270] sm:$0xf] %vm957, %v1262
        %1272 = vst.msk [vmem:[%s1270 + $0x4] sm:$0xf] %vm957, %v1263
        %1273 = vst.msk [vmem:[%s1270 + $0x8] sm:$0xf] %vm957, %v1264
        %1274 = vst.msk [vmem:[%s1270 + $0xc] sm:$0xf] %vm957, %v1265
        %1275 = vrot.lane.b32.xlu0 %v826, 48
        %v1276 = vpop.permute.xlu0 %1275
        %1277 = vrot.lane.b32.xlu0 %v827, 48
        %v1278 = vpop.permute.xlu0 %1277
        %v1282 = vsel %vm896, %v1254, 0
        %v1285 = vsel %vm896, %v1255, 0
        %1287 = vmatprep.subr.bf16.mxu0 0
        %1288 = vmatpush1.bf16.msra.mxu0 %v1276
        %1289 = vmatprep.subr.bf16.mxu0 0
        %1290 = vmatpush1.bf16.msra.mxu0 %v1278
        %1291 = vmatprep.subr.bf16.mxu0 0
        %1292 = vmatpush1.bf16.msra.mxu0 0
        %1293 = vmatprep.subr.bf16.mxu0 0
        %1294 = vmatpush1.bf16.msra.mxu0 0
        %1295 = vmatprep.subr.bf16.mxu0 0
        %1296 = vmatpush1.bf16.msra.mxu0 0
        %1297 = vmatprep.subr.bf16.mxu0 0
        %1298 = vmatpush1.bf16.msra.mxu0 0
        %1299 = vmatprep.subr.bf16.mxu0 0
        %1300 = vmatpush1.bf16.msra.mxu0 0
        %1301 = vmatprep.subr.bf16.mxu0 0
        %1302 = vmatpush1.bf16.msra.mxu0 0
        %1303 = vmatprep.subr.bf16.mxu0 0
        %1304 = vmatpush1.bf16.msra.mxu0 0
        %1305 = vmatprep.subr.bf16.mxu0 0
        %1306 = vmatpush1.bf16.msra.mxu0 0
        %1307 = vmatprep.subr.bf16.mxu0 0
        %1308 = vmatpush1.bf16.msra.mxu0 0
        %1309 = vmatprep.subr.bf16.mxu0 0
        %1310 = vmatpush1.bf16.msra.mxu0 0
        %1311 = vmatprep.subr.bf16.mxu0 0
        %1312 = vmatpush1.bf16.msra.mxu0 0
        %1313 = vmatprep.subr.bf16.mxu0 0
        %1314 = vmatpush1.bf16.msra.mxu0 0
        %1315 = vmatprep.subr.bf16.mxu0 0
        %1316 = vmatpush1.bf16.msra.mxu0 0
        %1317 = vmatprep.subr.bf16.mxu0 0
        %1318 = vmatpush1.bf16.msra.mxu0 0
        %1319 = vmatprep.mubr.bf16.mxu0 0
        %1320 = vmatmul.mubr.bf16.gmra.mrb[0].mxu0 %v1282
        %v1321 = vpop.f32.mrb[0].mxu0
        %v1322 = vadd.f32 0.0, %v1321
        %v1323 = vpop.f32.mrb[0].mxu0
        %v1324 = vpop.f32.mrb[0].mxu0
        %v1325 = vadd.f32 0.0, %v1324
        %v1326 = vpop.f32.mrb[0].mxu0
        %1327 = vmatprep.mubr.bf16.mxu0 0
        %1328 = vmatmul.mubr.bf16.gmra.mrb[0].mxu0 %v1285
        %v1329 = vpop.f32.mrb[0].mxu0
        %v1330 = vadd.f32 0.0, %v1329
        %v1331 = vpop.f32.mrb[0].mxu0
        %v1332 = vpop.f32.mrb[0].mxu0
        %v1333 = vadd.f32 0.0, %v1332
        %v1334 = vpop.f32.mrb[0].mxu0
        %1335 = vdwg.mxu0
        %v1336 = vpack.c.bf16 %v1325, %v1322
        %v1337 = vpack.c.bf16 %v1333, %v1330
        %1340 = vrot.lane.b32.xlu0 %v1336, 16
        %v1341 = vpop.permute.xlu0 %1340
        %1342 = vrot.lane.b32.xlu0 %v1337, 16
        %v1343 = vpop.permute.xlu0 %1342
        %vm1346 = vcmask 261248
        %1347 = vst.msk [vmem:[#allocation2] sm:$0xff] %vm1346, %v1341
        %1348 = vst.msk [vmem:[#allocation2 + $0x8] sm:$0xff] %vm1346, %v1343
        %1349 = vrot.lane.b32.xlu0 %v550, 32
        %v1350 = vpop.permute.xlu0 %1349
        %1351 = vrot.lane.b32.xlu0 %v551, 32
        %v1352 = vpop.permute.xlu0 %1351
        %1353 = vrot.lane.b32.xlu0 %v552, 32
        %v1354 = vpop.permute.xlu0 %1353
        %1355 = vrot.lane.b32.xlu0 %v553, 32
        %v1356 = vpop.permute.xlu0 %1355
        %v1361 = vmul.f32 %v729, %v1350
        %v1362 = vmul.f32 %v730, %v1352
        %v1363 = vmul.f32 %v731, %v1354
        %v1364 = vmul.f32 %v732, %v1356
        %1365 = vrot.lane.b32.xlu0 %v729, 88
        %v1366 = vpop.permute.xlu0 %1365
        %1367 = vrot.lane.b32.xlu0 %v730, 88
        %v1368 = vpop.permute.xlu0 %1367
        %1369 = vrot.lane.b32.xlu0 %v731, 88
        %v1370 = vpop.permute.xlu0 %1369
        %1371 = vrot.lane.b32.xlu0 %v732, 88
        %v1372 = vpop.permute.xlu0 %1371
        %v1377 = vsel %vm765, %v1366, %v1050
        %v1378 = vsel %vm765, %v1368, %v1052
        %v1379 = vsel %vm765, %v1370, %v1054
        %v1380 = vsel %vm765, %v1372, %v1056
        %v1381 = vmul.f32 %v1377, %v554
        %v1382 = vmul.f32 %v1378, %v555
        %v1383 = vmul.f32 %v1379, %v556
        %v1384 = vmul.f32 %v1380, %v557
        %1389 = vrot.lane.b32.xlu0 %v1381, 32
        %v1390 = vpop.permute.xlu0 %1389
        %1391 = vrot.lane.b32.xlu0 %v1382, 32
        %v1392 = vpop.permute.xlu0 %1391
        %1393 = vrot.lane.b32.xlu0 %v1383, 32
        %v1394 = vpop.permute.xlu0 %1393
        %1395 = vrot.lane.b32.xlu0 %v1384, 32
        %v1396 = vpop.permute.xlu0 %1395
        %v1401 = vadd.f32 %v1361, %v1390
        %v1402 = vadd.f32 %v1362, %v1392
        %v1403 = vadd.f32 %v1363, %v1394
        %v1404 = vadd.f32 %v1364, %v1396
        %v1405 = vpack.c.bf16 %v1402, %v1401
        %v1406 = vpack.c.bf16 %v1404, %v1403
        %v1407 = vmul.f32 %v711, %v1350
        %v1408 = vmul.f32 %v715, %v1352
        %v1409 = vmul.f32 %v721, %v1354
        %v1410 = vmul.f32 %v725, %v1356
        %1411 = vrot.lane.b32.xlu0 %v711, 88
        %v1412 = vpop.permute.xlu0 %1411
        %1413 = vrot.lane.b32.xlu0 %v715, 88
        %v1414 = vpop.permute.xlu0 %1413
        %1415 = vrot.lane.b32.xlu0 %v721, 88
        %v1416 = vpop.permute.xlu0 %1415
        %1417 = vrot.lane.b32.xlu0 %v725, 88
        %v1418 = vpop.permute.xlu0 %1417
        %v1423 = vsel %vm765, %v1412, %v1096
        %v1424 = vsel %vm765, %v1414, %v1098
        %v1425 = vsel %vm765, %v1416, %v1100
        %v1426 = vsel %vm765, %v1418, %v1102
        %v1427 = vmul.f32 %v1423, %v554
        %v1428 = vmul.f32 %v1424, %v555
        %v1429 = vmul.f32 %v1425, %v556
        %v1430 = vmul.f32 %v1426, %v557
        %1435 = vrot.lane.b32.xlu0 %v1427, 32
        %v1436 = vpop.permute.xlu0 %1435
        %1437 = vrot.lane.b32.xlu0 %v1428, 32
        %v1438 = vpop.permute.xlu0 %1437
        %1439 = vrot.lane.b32.xlu0 %v1429, 32
        %v1440 = vpop.permute.xlu0 %1439
        %1441 = vrot.lane.b32.xlu0 %v1430, 32
        %v1442 = vpop.permute.xlu0 %1441
        %v1447 = vadd.f32 %v1407, %v1436
        %v1448 = vadd.f32 %v1408, %v1438
        %v1449 = vadd.f32 %v1409, %v1440
        %v1450 = vadd.f32 %v1410, %v1442
        %v1451 = vpack.c.bf16 %v1448, %v1447
        %v1452 = vpack.c.bf16 %v1450, %v1449
        %1455 = vrot.lane.b32.xlu0 %v1405, 96
        %v1456 = vpop.permute.xlu0 %1455
        %1457 = vrot.lane.b32.xlu0 %v1406, 96
        %v1458 = vpop.permute.xlu0 %1457
        %1461 = vrot.lane.b32.xlu0 %v1451, 96
        %v1462 = vpop.permute.xlu0 %1461
        %1463 = vrot.lane.b32.xlu0 %v1452, 96
        %v1464 = vpop.permute.xlu0 %1463
        %v1466 = vsel %vm834, %v1456, 0
        %v1469 = vsel %vm834, %v1458, 0
        %v1472 = vsel %vm834, %v1462, 0
        %v1475 = vsel %vm834, %v1464, 0
        %1477 = vmatprep.subr.bf16.mxu0 0
        %1478 = vmatpush1.bf16.xpose.msra.mxu0 %v1472
        %1479 = vmatprep.subr.bf16.mxu0 0
        %1480 = vmatpush1.bf16.xpose.msra.mxu0 %v1475
        %1481 = vmatprep.subr.bf16.mxu0 0
        %1482 = vmatpush1.bf16.xpose.msra.mxu0 0
        %1483 = vmatprep.subr.bf16.mxu0 0
        %1484 = vmatpush1.bf16.xpose.msra.mxu0 0
        %1485 = vmatprep.subr.bf16.mxu0 0
        %1486 = vmatpush1.bf16.xpose.msra.mxu0 0
        %1487 = vmatprep.subr.bf16.mxu0 0
        %1488 = vmatpush1.bf16.xpose.msra.mxu0 0
        %1489 = vmatprep.subr.bf16.mxu0 0
        %1490 = vmatpush1.bf16.xpose.msra.mxu0 0
        %1491 = vmatprep.subr.bf16.mxu0 0
        %1492 = vmatpush1.bf16.xpose.msra.mxu0 0
        %1493 = vmatprep.subr.bf16.mxu0 0
        %1494 = vmatpush1.bf16.xpose.msra.mxu0 0
        %1495 = vmatprep.subr.bf16.mxu0 0
        %1496 = vmatpush1.bf16.xpose.msra.mxu0 0
        %1497 = vmatprep.subr.bf16.mxu0 0
        %1498 = vmatpush1.bf16.xpose.msra.mxu0 0
        %1499 = vmatprep.subr.bf16.mxu0 0
        %1500 = vmatpush1.bf16.xpose.msra.mxu0 0
        %1501 = vmatprep.subr.bf16.mxu0 0
        %1502 = vmatpush1.bf16.xpose.msra.mxu0 0
        %1503 = vmatprep.subr.bf16.mxu0 0
        %1504 = vmatpush1.bf16.xpose.msra.mxu0 0
        %1505 = vmatprep.subr.bf16.mxu0 0
        %1506 = vmatpush1.bf16.xpose.msra.mxu0 0
        %1507 = vmatprep.subr.bf16.mxu0 0
        %1508 = vmatpush1.bf16.xpose.msra.mxu0 0
        %1509 = vmatprep.mubr.bf16.mxu0 0
        %1510 = vmatmul.mubr.bf16.gmra.mrb[0].mxu0 %v1466
        %v1511 = vpop.f32.mrb[0].mxu0
        %v1512 = vadd.f32 %v832, %v1511
        %v1513 = vpop.f32.mrb[0].mxu0
        %v1514 = vpop.f32.mrb[0].mxu0
        %v1515 = vadd.f32 %v832, %v1514
        %v1516 = vpop.f32.mrb[0].mxu0
        %1517 = vmatprep.mubr.bf16.mxu0 0
        %1518 = vmatmul.mubr.bf16.gmra.mrb[0].mxu0 %v1469
        %v1519 = vpop.f32.mrb[0].mxu0
        %v1520 = vadd.f32 %v832, %v1519
        %v1521 = vpop.f32.mrb[0].mxu0
        %v1522 = vpop.f32.mrb[0].mxu0
        %v1523 = vadd.f32 %v832, %v1522
        %v1524 = vpop.f32.mrb[0].mxu0
        %1525 = vdwg.mxu0
        %v1526 = vsel %vm896, %v1512, -inf
        %1527 = vmax.xlane.f32.xlu0 %v1526
        %v1528 = vpop.xlane.xlu0 %1527
        %v1529 = vsel %vm896, %v1515, -inf
        %1530 = vmax.xlane.f32.xlu0 %v1529
        %v1531 = vpop.xlane.xlu0 %1530
        %v1532 = vsel %vm896, %v1520, -inf
        %1533 = vmax.xlane.f32.xlu0 %v1532
        %v1534 = vpop.xlane.xlu0 %1533
        %v1535 = vsel %vm896, %v1523, -inf
        %1536 = vmax.xlane.f32.xlu0 %v1535
        %v1537 = vpop.xlane.xlu0 %1536
        %v1538 = vsub.f32 %v1512, %v1528
        %v1539 = vsub.f32 %v1515, %v1531
        %v1540 = vsub.f32 %v1520, %v1534
        %v1541 = vsub.f32 %v1523, %v1537
        %v1542 = vmul.f32 %v1538, 1.442695
        %v1543 = vpow.pop %v1542
        %v1544 = vmul.f32 %v1539, 1.442695
        %v1545 = vpow.pop %v1544
        %v1546 = vmul.f32 %v1540, 1.442695
        %v1547 = vpow.pop %v1546
        %v1548 = vmul.f32 %v1541, 1.442695
        %v1549 = vpow.pop %v1548
        %v1550 = vsel %vm896, %v1543, 0.0
        %1551 = vadd.xlane.f32.xlu0 %v1550
        %v1552 = vpop.xlane.xlu0 %1551
        %v1553 = vsel %vm896, %v1545, 0.0
        %1554 = vadd.xlane.f32.xlu0 %v1553
        %v1555 = vpop.xlane.xlu0 %1554
        %v1556 = vsel %vm896, %v1547, 0.0
        %1557 = vadd.xlane.f32.xlu0 %v1556
        %v1558 = vpop.xlane.xlu0 %1557
        %v1559 = vsel %vm896, %v1549, 0.0
        %1560 = vadd.xlane.f32.xlu0 %v1559
        %v1561 = vpop.xlane.xlu0 %1560
        %v1562 = vrcp.pop %v1552
        %v1563 = vrcp.pop %v1555
        %v1564 = vrcp.pop %v1558
        %v1565 = vrcp.pop %v1561
        %v1566 = vmul.f32 %v1543, %v1562
        %v1567 = vmul.f32 %v1545, %v1563
        %v1568 = vmul.f32 %v1547, %v1564
        %v1569 = vmul.f32 %v1549, %v1565
        %v1570 = vpack.c.bf16 %v1567, %v1566
        %v1571 = vpack.c.bf16 %v1569, %v1568
        %v1574 = vunpack.c.l.b16 %v1570
        %v1575 = vunpack.c.h.b16 %v1570
        %v1576 = vunpack.c.l.b16 %v1571
        %v1577 = vunpack.c.h.b16 %v1571
        %v1578 = vpack.c.b16 %v1574, %v1574
        %v1579 = vpack.c.b16 %v1575, %v1575
        %v1580 = vpack.c.b16 %v1576, %v1576
        %v1581 = vpack.c.b16 %v1577, %v1577
        %s1586 = scalar_lea.vmem %s536, 32 [#allocation10]
        %1587 = vst.msk [vmem:[%s1586] sm:$0xf] %vm957, %v1578
        %1588 = vst.msk [vmem:[%s1586 + $0x4] sm:$0xf] %vm957, %v1579
        %1589 = vst.msk [vmem:[%s1586 + $0x8] sm:$0xf] %vm957, %v1580
        %1590 = vst.msk [vmem:[%s1586 + $0xc] sm:$0xf] %vm957, %v1581
        %1591 = vrot.lane.b32.xlu0 %v826, 32
        %v1592 = vpop.permute.xlu0 %1591
        %1593 = vrot.lane.b32.xlu0 %v827, 32
        %v1594 = vpop.permute.xlu0 %1593
        %v1598 = vsel %vm896, %v1570, 0
        %v1601 = vsel %vm896, %v1571, 0
        %1603 = vmatprep.subr.bf16.mxu0 0
        %1604 = vmatpush1.bf16.msra.mxu0 %v1592
        %1605 = vmatprep.subr.bf16.mxu0 0
        %1606 = vmatpush1.bf16.msra.mxu0 %v1594
        %1607 = vmatprep.subr.bf16.mxu0 0
        %1608 = vmatpush1.bf16.msra.mxu0 0
        %1609 = vmatprep.subr.bf16.mxu0 0
        %1610 = vmatpush1.bf16.msra.mxu0 0
        %1611 = vmatprep.subr.bf16.mxu0 0
        %1612 = vmatpush1.bf16.msra.mxu0 0
        %1613 = vmatprep.subr.bf16.mxu0 0
        %1614 = vmatpush1.bf16.msra.mxu0 0
        %1615 = vmatprep.subr.bf16.mxu0 0
        %1616 = vmatpush1.bf16.msra.mxu0 0
        %1617 = vmatprep.subr.bf16.mxu0 0
        %1618 = vmatpush1.bf16.msra.mxu0 0
        %1619 = vmatprep.subr.bf16.mxu0 0
        %1620 = vmatpush1.bf16.msra.mxu0 0
        %1621 = vmatprep.subr.bf16.mxu0 0
        %1622 = vmatpush1.bf16.msra.mxu0 0
        %1623 = vmatprep.subr.bf16.mxu0 0
        %1624 = vmatpush1.bf16.msra.mxu0 0
        %1625 = vmatprep.subr.bf16.mxu0 0
        %1626 = vmatpush1.bf16.msra.mxu0 0
        %1627 = vmatprep.subr.bf16.mxu0 0
        %1628 = vmatpush1.bf16.msra.mxu0 0
        %1629 = vmatprep.subr.bf16.mxu0 0
        %1630 = vmatpush1.bf16.msra.mxu0 0
        %1631 = vmatprep.subr.bf16.mxu0 0
        %1632 = vmatpush1.bf16.msra.mxu0 0
        %1633 = vmatprep.subr.bf16.mxu0 0
        %1634 = vmatpush1.bf16.msra.mxu0 0
        %1635 = vmatprep.mubr.bf16.mxu0 0
        %1636 = vmatmul.mubr.bf16.gmra.mrb[0].mxu0 %v1598
        %v1637 = vpop.f32.mrb[0].mxu0
        %v1638 = vadd.f32 0.0, %v1637
        %v1639 = vpop.f32.mrb[0].mxu0
        %v1640 = vpop.f32.mrb[0].mxu0
        %v1641 = vadd.f32 0.0, %v1640
        %v1642 = vpop.f32.mrb[0].mxu0
        %1643 = vmatprep.mubr.bf16.mxu0 0
        %1644 = vmatmul.mubr.bf16.gmra.mrb[0].mxu0 %v1601
        %v1645 = vpop.f32.mrb[0].mxu0
        %v1646 = vadd.f32 0.0, %v1645
        %v1647 = vpop.f32.mrb[0].mxu0
        %v1648 = vpop.f32.mrb[0].mxu0
        %v1649 = vadd.f32 0.0, %v1648
        %v1650 = vpop.f32.mrb[0].mxu0
        %1651 = vdwg.mxu0
        %v1652 = vpack.c.bf16 %v1641, %v1638
        %v1653 = vpack.c.bf16 %v1649, %v1646
        %1656 = vrot.lane.b32.xlu0 %v1652, 32
        %v1657 = vpop.permute.xlu0 %1656
        %1658 = vrot.lane.b32.xlu0 %v1653, 32
        %v1659 = vpop.permute.xlu0 %1658
        %vm1662 = vcmask 392448
        %1663 = vst.msk [vmem:[#allocation2] sm:$0xff] %vm1662, %v1657
        %1664 = vst.msk [vmem:[#allocation2 + $0x8] sm:$0xff] %vm1662, %v1659
        %1665 = vrot.lane.b32.xlu0 %v550, 48
        %v1666 = vpop.permute.xlu0 %1665
        %1667 = vrot.lane.b32.xlu0 %v551, 48
        %v1668 = vpop.permute.xlu0 %1667
        %1669 = vrot.lane.b32.xlu0 %v552, 48
        %v1670 = vpop.permute.xlu0 %1669
        %1671 = vrot.lane.b32.xlu0 %v553, 48
        %v1672 = vpop.permute.xlu0 %1671
        %v1677 = vmul.f32 %v729, %v1666
        %v1678 = vmul.f32 %v730, %v1668
        %v1679 = vmul.f32 %v731, %v1670
        %v1680 = vmul.f32 %v732, %v1672
        %1681 = vrot.lane.b32.xlu0 %v729, 72
        %v1682 = vpop.permute.xlu0 %1681
        %1683 = vrot.lane.b32.xlu0 %v730, 72
        %v1684 = vpop.permute.xlu0 %1683
        %1685 = vrot.lane.b32.xlu0 %v731, 72
        %v1686 = vpop.permute.xlu0 %1685
        %1687 = vrot.lane.b32.xlu0 %v732, 72
        %v1688 = vpop.permute.xlu0 %1687
        %v1693 = vsel %vm765, %v1682, %v1366
        %v1694 = vsel %vm765, %v1684, %v1368
        %v1695 = vsel %vm765, %v1686, %v1370
        %v1696 = vsel %vm765, %v1688, %v1372
        %v1697 = vmul.f32 %v1693, %v554
        %v1698 = vmul.f32 %v1694, %v555
        %v1699 = vmul.f32 %v1695, %v556
        %v1700 = vmul.f32 %v1696, %v557
        %1705 = vrot.lane.b32.xlu0 %v1697, 48
        %v1706 = vpop.permute.xlu0 %1705
        %1707 = vrot.lane.b32.xlu0 %v1698, 48
        %v1708 = vpop.permute.xlu0 %1707
        %1709 = vrot.lane.b32.xlu0 %v1699, 48
        %v1710 = vpop.permute.xlu0 %1709
        %1711 = vrot.lane.b32.xlu0 %v1700, 48
        %v1712 = vpop.permute.xlu0 %1711
        %v1717 = vadd.f32 %v1677, %v1706
        %v1718 = vadd.f32 %v1678, %v1708
        %v1719 = vadd.f32 %v1679, %v1710
        %v1720 = vadd.f32 %v1680, %v1712
        %v1721 = vpack.c.bf16 %v1718, %v1717
        %v1722 = vpack.c.bf16 %v1720, %v1719
        %v1723 = vmul.f32 %v711, %v1666
        %v1724 = vmul.f32 %v715, %v1668
        %v1725 = vmul.f32 %v721, %v1670
        %v1726 = vmul.f32 %v725, %v1672
        %1727 = vrot.lane.b32.xlu0 %v711, 72
        %v1728 = vpop.permute.xlu0 %1727
        %1729 = vrot.lane.b32.xlu0 %v715, 72
        %v1730 = vpop.permute.xlu0 %1729
        %1731 = vrot.lane.b32.xlu0 %v721, 72
        %v1732 = vpop.permute.xlu0 %1731
        %1733 = vrot.lane.b32.xlu0 %v725, 72
        %v1734 = vpop.permute.xlu0 %1733
        %v1739 = vsel %vm765, %v1728, %v1412
        %v1740 = vsel %vm765, %v1730, %v1414
        %v1741 = vsel %vm765, %v1732, %v1416
        %v1742 = vsel %vm765, %v1734, %v1418
        %v1743 = vmul.f32 %v1739, %v554
        %v1744 = vmul.f32 %v1740, %v555
        %v1745 = vmul.f32 %v1741, %v556
        %v1746 = vmul.f32 %v1742, %v557
        %1751 = vrot.lane.b32.xlu0 %v1743, 48
        %v1752 = vpop.permute.xlu0 %1751
        %1753 = vrot.lane.b32.xlu0 %v1744, 48
        %v1754 = vpop.permute.xlu0 %1753
        %1755 = vrot.lane.b32.xlu0 %v1745, 48
        %v1756 = vpop.permute.xlu0 %1755
        %1757 = vrot.lane.b32.xlu0 %v1746, 48
        %v1758 = vpop.permute.xlu0 %1757
        %v1763 = vadd.f32 %v1723, %v1752
        %v1764 = vadd.f32 %v1724, %v1754
        %v1765 = vadd.f32 %v1725, %v1756
        %v1766 = vadd.f32 %v1726, %v1758
        %v1767 = vpack.c.bf16 %v1764, %v1763
        %v1768 = vpack.c.bf16 %v1766, %v1765
        %1771 = vrot.lane.b32.xlu0 %v1721, 80
        %v1772 = vpop.permute.xlu0 %1771
        %1773 = vrot.lane.b32.xlu0 %v1722, 80
        %v1774 = vpop.permute.xlu0 %1773
        %1777 = vrot.lane.b32.xlu0 %v1767, 80
        %v1778 = vpop.permute.xlu0 %1777
        %1779 = vrot.lane.b32.xlu0 %v1768, 80
        %v1780 = vpop.permute.xlu0 %1779
        %v1782 = vsel %vm834, %v1772, 0
        %v1785 = vsel %vm834, %v1774, 0
        %v1788 = vsel %vm834, %v1778, 0
        %v1791 = vsel %vm834, %v1780, 0
        %1793 = vmatprep.subr.bf16.mxu0 0
        %1794 = vmatpush1.bf16.xpose.msra.mxu0 %v1788
        %1795 = vmatprep.subr.bf16.mxu0 0
        %1796 = vmatpush1.bf16.xpose.msra.mxu0 %v1791
        %1797 = vmatprep.subr.bf16.mxu0 0
        %1798 = vmatpush1.bf16.xpose.msra.mxu0 0
        %1799 = vmatprep.subr.bf16.mxu0 0
        %1800 = vmatpush1.bf16.xpose.msra.mxu0 0
        %1801 = vmatprep.subr.bf16.mxu0 0
        %1802 = vmatpush1.bf16.xpose.msra.mxu0 0
        %1803 = vmatprep.subr.bf16.mxu0 0
        %1804 = vmatpush1.bf16.xpose.msra.mxu0 0
        %1805 = vmatprep.subr.bf16.mxu0 0
        %1806 = vmatpush1.bf16.xpose.msra.mxu0 0
        %1807 = vmatprep.subr.bf16.mxu0 0
        %1808 = vmatpush1.bf16.xpose.msra.mxu0 0
        %1809 = vmatprep.subr.bf16.mxu0 0
        %1810 = vmatpush1.bf16.xpose.msra.mxu0 0
        %1811 = vmatprep.subr.bf16.mxu0 0
        %1812 = vmatpush1.bf16.xpose.msra.mxu0 0
        %1813 = vmatprep.subr.bf16.mxu0 0
        %1814 = vmatpush1.bf16.xpose.msra.mxu0 0
        %1815 = vmatprep.subr.bf16.mxu0 0
        %1816 = vmatpush1.bf16.xpose.msra.mxu0 0
        %1817 = vmatprep.subr.bf16.mxu0 0
        %1818 = vmatpush1.bf16.xpose.msra.mxu0 0
        %1819 = vmatprep.subr.bf16.mxu0 0
        %1820 = vmatpush1.bf16.xpose.msra.mxu0 0
        %1821 = vmatprep.subr.bf16.mxu0 0
        %1822 = vmatpush1.bf16.xpose.msra.mxu0 0
        %1823 = vmatprep.subr.bf16.mxu0 0
        %1824 = vmatpush1.bf16.xpose.msra.mxu0 0
        %1825 = vmatprep.mubr.bf16.mxu0 0
        %1826 = vmatmul.mubr.bf16.gmra.mrb[0].mxu0 %v1782
        %v1827 = vpop.f32.mrb[0].mxu0
        %v1828 = vadd.f32 %v832, %v1827
        %v1829 = vpop.f32.mrb[0].mxu0
        %v1830 = vpop.f32.mrb[0].mxu0
        %v1831 = vadd.f32 %v832, %v1830
        %v1832 = vpop.f32.mrb[0].mxu0
        %1833 = vmatprep.mubr.bf16.mxu0 0
        %1834 = vmatmul.mubr.bf16.gmra.mrb[0].mxu0 %v1785
        %v1835 = vpop.f32.mrb[0].mxu0
        %v1836 = vadd.f32 %v832, %v1835
        %v1837 = vpop.f32.mrb[0].mxu0
        %v1838 = vpop.f32.mrb[0].mxu0
        %v1839 = vadd.f32 %v832, %v1838
        %v1840 = vpop.f32.mrb[0].mxu0
        %1841 = vdwg.mxu0
        %v1842 = vsel %vm896, %v1828, -inf
        %1843 = vmax.xlane.f32.xlu0 %v1842
        %v1844 = vpop.xlane.xlu0 %1843
        %v1845 = vsel %vm896, %v1831, -inf
        %1846 = vmax.xlane.f32.xlu0 %v1845
        %v1847 = vpop.xlane.xlu0 %1846
        %v1848 = vsel %vm896, %v1836, -inf
        %1849 = vmax.xlane.f32.xlu0 %v1848
        %v1850 = vpop.xlane.xlu0 %1849
        %v1851 = vsel %vm896, %v1839, -inf
        %1852 = vmax.xlane.f32.xlu0 %v1851
        %v1853 = vpop.xlane.xlu0 %1852
        %v1854 = vsub.f32 %v1828, %v1844
        %v1855 = vsub.f32 %v1831, %v1847
        %v1856 = vsub.f32 %v1836, %v1850
        %v1857 = vsub.f32 %v1839, %v1853
        %v1858 = vmul.f32 %v1854, 1.442695
        %v1859 = vpow.pop %v1858
        %v1860 = vmul.f32 %v1855, 1.442695
        %v1861 = vpow.pop %v1860
        %v1862 = vmul.f32 %v1856, 1.442695
        %v1863 = vpow.pop %v1862
        %v1864 = vmul.f32 %v1857, 1.442695
        %v1865 = vpow.pop %v1864
        %v1866 = vsel %vm896, %v1859, 0.0
        %1867 = vadd.xlane.f32.xlu0 %v1866
        %v1868 = vpop.xlane.xlu0 %1867
        %v1869 = vsel %vm896, %v1861, 0.0
        %1870 = vadd.xlane.f32.xlu0 %v1869
        %v1871 = vpop.xlane.xlu0 %1870
        %v1872 = vsel %vm896, %v1863, 0.0
        %1873 = vadd.xlane.f32.xlu0 %v1872
        %v1874 = vpop.xlane.xlu0 %1873
        %v1875 = vsel %vm896, %v1865, 0.0
        %1876 = vadd.xlane.f32.xlu0 %v1875
        %v1877 = vpop.xlane.xlu0 %1876
        %v1878 = vrcp.pop %v1868
        %v1879 = vrcp.pop %v1871
        %v1880 = vrcp.pop %v1874
        %v1881 = vrcp.pop %v1877
        %v1882 = vmul.f32 %v1859, %v1878
        %v1883 = vmul.f32 %v1861, %v1879
        %v1884 = vmul.f32 %v1863, %v1880
        %v1885 = vmul.f32 %v1865, %v1881
        %v1886 = vpack.c.bf16 %v1883, %v1882
        %v1887 = vpack.c.bf16 %v1885, %v1884
        %v1890 = vunpack.c.l.b16 %v1886
        %v1891 = vunpack.c.h.b16 %v1886
        %v1892 = vunpack.c.l.b16 %v1887
        %v1893 = vunpack.c.h.b16 %v1887
        %v1894 = vpack.c.b16 %v1890, %v1890
        %v1895 = vpack.c.b16 %v1891, %v1891
        %v1896 = vpack.c.b16 %v1892, %v1892
        %v1897 = vpack.c.b16 %v1893, %v1893
        %s1902 = scalar_lea.vmem %s536, 48 [#allocation10]
        %1903 = vst.msk [vmem:[%s1902] sm:$0xf] %vm957, %v1894
        %1904 = vst.msk [vmem:[%s1902 + $0x4] sm:$0xf] %vm957, %v1895
        %1905 = vst.msk [vmem:[%s1902 + $0x8] sm:$0xf] %vm957, %v1896
        %1906 = vst.msk [vmem:[%s1902 + $0xc] sm:$0xf] %vm957, %v1897
        %1907 = vrot.lane.b32.xlu0 %v826, 16
        %v1908 = vpop.permute.xlu0 %1907
        %1909 = vrot.lane.b32.xlu0 %v827, 16
        %v1910 = vpop.permute.xlu0 %1909
        %v1914 = vsel %vm896, %v1886, 0
        %v1917 = vsel %vm896, %v1887, 0
        %1919 = vmatprep.subr.bf16.mxu0 0
        %1920 = vmatpush1.bf16.msra.mxu0 %v1908
        %1921 = vmatprep.subr.bf16.mxu0 0
        %1922 = vmatpush1.bf16.msra.mxu0 %v1910
        %1923 = vmatprep.subr.bf16.mxu0 0
        %1924 = vmatpush1.bf16.msra.mxu0 0
        %1925 = vmatprep.subr.bf16.mxu0 0
        %1926 = vmatpush1.bf16.msra.mxu0 0
        %1927 = vmatprep.subr.bf16.mxu0 0
        %1928 = vmatpush1.bf16.msra.mxu0 0
        %1929 = vmatprep.subr.bf16.mxu0 0
        %1930 = vmatpush1.bf16.msra.mxu0 0
        %1931 = vmatprep.subr.bf16.mxu0 0
        %1932 = vmatpush1.bf16.msra.mxu0 0
        %1933 = vmatprep.subr.bf16.mxu0 0
        %1934 = vmatpush1.bf16.msra.mxu0 0
        %1935 = vmatprep.subr.bf16.mxu0 0
        %1936 = vmatpush1.bf16.msra.mxu0 0
        %1937 = vmatprep.subr.bf16.mxu0 0
        %1938 = vmatpush1.bf16.msra.mxu0 0
        %1939 = vmatprep.subr.bf16.mxu0 0
        %1940 = vmatpush1.bf16.msra.mxu0 0
        %1941 = vmatprep.subr.bf16.mxu0 0
        %1942 = vmatpush1.bf16.msra.mxu0 0
        %1943 = vmatprep.subr.bf16.mxu0 0
        %1944 = vmatpush1.bf16.msra.mxu0 0
        %1945 = vmatprep.subr.bf16.mxu0 0
        %1946 = vmatpush1.bf16.msra.mxu0 0
        %1947 = vmatprep.subr.bf16.mxu0 0
        %1948 = vmatpush1.bf16.msra.mxu0 0
        %1949 = vmatprep.subr.bf16.mxu0 0
        %1950 = vmatpush1.bf16.msra.mxu0 0
        %1951 = vmatprep.mubr.bf16.mxu0 0
        %1952 = vmatmul.mubr.bf16.gmra.mrb[0].mxu0 %v1914
        %v1953 = vpop.f32.mrb[0].mxu0
        %v1954 = vadd.f32 0.0, %v1953
        %v1955 = vpop.f32.mrb[0].mxu0
        %v1956 = vpop.f32.mrb[0].mxu0
        %v1957 = vadd.f32 0.0, %v1956
        %v1958 = vpop.f32.mrb[0].mxu0
        %1959 = vmatprep.mubr.bf16.mxu0 0
        %1960 = vmatmul.mubr.bf16.gmra.mrb[0].mxu0 %v1917
        %v1961 = vpop.f32.mrb[0].mxu0
        %v1962 = vadd.f32 0.0, %v1961
        %v1963 = vpop.f32.mrb[0].mxu0
        %v1964 = vpop.f32.mrb[0].mxu0
        %v1965 = vadd.f32 0.0, %v1964
        %v1966 = vpop.f32.mrb[0].mxu0
        %1967 = vdwg.mxu0
        %v1968 = vpack.c.bf16 %v1957, %v1954
        %v1969 = vpack.c.bf16 %v1965, %v1962
        %1972 = vrot.lane.b32.xlu0 %v1968, 48
        %v1973 = vpop.permute.xlu0 %1972
        %1974 = vrot.lane.b32.xlu0 %v1969, 48
        %v1975 = vpop.permute.xlu0 %1974
        %vm1978 = vcmask 523648
        %1979 = vst.msk [vmem:[#allocation2] sm:$0xff] %vm1978, %v1973
        %1980 = vst.msk [vmem:[#allocation2 + $0x8] sm:$0xff] %vm1978, %v1975
        %v1981 = vld [vmem:[#allocation2] sm:$0xff]
        %v1982 = vld [vmem:[#allocation2 + $0x8] sm:$0xff]
        %v1983 = vld [vmem:[%s7] sm:$0xf]
        %v1984 = vld [vmem:[%s7 + $0x4] sm:$0xf]
        %v1985 = vld [vmem:[%s7 + $0x8] sm:$0xf]
        %v1986 = vld [vmem:[%s7 + $0xc] sm:$0xf]
        %v1987 = vld [vmem:[%s7 + $0x10] sm:$0xf]
        %v1988 = vld [vmem:[%s7 + $0x14] sm:$0xf]
        %v1989 = vld [vmem:[%s7 + $0x18] sm:$0xf]
        %v1990 = vld [vmem:[%s7 + $0x1c] sm:$0xf]
        %v1991 = vld [vmem:[#allocation8] sm:$0x1]
        %v1993 = vlaneseq
        %v1994 = vshrl.u32 %v1993, 7
        %v1995 = vsub.s32 0, %v1994
        %v1996 = vrot.slane %v1991, %v1995
        %v2006 = vunpack.c.l.b16 %v1983
        %v2007 = vunpack.c.l.b16 %v1984
        %v2008 = vunpack.c.l.b16 %v1985
        %v2009 = vunpack.c.l.b16 %v1986
        %v2010 = vunpack.c.l.b16 %v1987
        %v2011 = vunpack.c.l.b16 %v1988
        %v2012 = vunpack.c.l.b16 %v1989
        %v2013 = vunpack.c.l.b16 %v1990
        %v2014 = vpack.c.b16 %v2007, %v2006
        %v2015 = vpack.c.b16 %v2009, %v2008
        %v2016 = vpack.c.b16 %v2011, %v2010
        %v2017 = vpack.c.b16 %v2013, %v2012
        %v2023 = vsel %vm568, %v1981, 0
        %v2026 = vsel %vm568, %v1982, 0
        %2028 = vmatprep.subr.bf16.mxu0 0
        %2029 = vmatpush1.bf16.msra.mxu0 %v2014
        %2030 = vmatprep.subr.bf16.mxu0 0
        %2031 = vmatpush1.bf16.msra.mxu0 %v2015
        %2032 = vmatprep.subr.bf16.mxu0 0
        %2033 = vmatpush1.bf16.msra.mxu0 %v2016
        %2034 = vmatprep.subr.bf16.mxu0 0
        %2035 = vmatpush1.bf16.msra.mxu0 %v2017
        %2036 = vmatprep.subr.bf16.mxu0 0
        %2037 = vmatpush1.bf16.msra.mxu0 0
        %2038 = vmatprep.subr.bf16.mxu0 0
        %2039 = vmatpush1.bf16.msra.mxu0 0
        %2040 = vmatprep.subr.bf16.mxu0 0
        %2041 = vmatpush1.bf16.msra.mxu0 0
        %2042 = vmatprep.subr.bf16.mxu0 0
        %2043 = vmatpush1.bf16.msra.mxu0 0
        %2044 = vmatprep.subr.bf16.mxu0 0
        %2045 = vmatpush1.bf16.msra.mxu0 0
        %2046 = vmatprep.subr.bf16.mxu0 0
        %2047 = vmatpush1.bf16.msra.mxu0 0
        %2048 = vmatprep.subr.bf16.mxu0 0
        %2049 = vmatpush1.bf16.msra.mxu0 0
        %2050 = vmatprep.subr.bf16.mxu0 0
        %2051 = vmatpush1.bf16.msra.mxu0 0
        %2052 = vmatprep.subr.bf16.mxu0 0
        %2053 = vmatpush1.bf16.msra.mxu0 0
        %2054 = vmatprep.subr.bf16.mxu0 0
        %2055 = vmatpush1.bf16.msra.mxu0 0
        %2056 = vmatprep.subr.bf16.mxu0 0
        %2057 = vmatpush1.bf16.msra.mxu0 0
        %2058 = vmatprep.subr.bf16.mxu0 0
        %2059 = vmatpush1.bf16.msra.mxu0 0
        %2060 = vmatprep.mubr.bf16.mxu0 0
        %2061 = vmatmul.mubr.bf16.gmra.mrb[0].mxu0 %v2023
        %v2062 = vpop.f32.mrb[0].mxu0
        %v2063 = vadd.f32 %v1996, %v2062
        %v2064 = vpop.f32.mrb[0].mxu0
        %v2065 = vpop.f32.mrb[0].mxu0
        %v2066 = vadd.f32 %v1996, %v2065
        %v2067 = vpop.f32.mrb[0].mxu0
        %2068 = vmatprep.mubr.bf16.mxu0 0
        %2069 = vmatmul.mubr.bf16.gmra.mrb[0].mxu0 %v2026
        %v2070 = vpop.f32.mrb[0].mxu0
        %v2071 = vadd.f32 %v1996, %v2070
        %v2072 = vpop.f32.mrb[0].mxu0
        %v2073 = vpop.f32.mrb[0].mxu0
        %v2074 = vadd.f32 %v1996, %v2073
        %v2075 = vpop.f32.mrb[0].mxu0
        %2076 = vdwg.mxu0
        %v2077 = vadd.f32 %v560, %v2063
        %v2078 = vadd.f32 %v561, %v2066
        %v2079 = vadd.f32 %v562, %v2071
        %v2080 = vadd.f32 %v563, %v2074
        %v2081 = vmul.f32 %v2077, %v2077
        %v2082 = vmul.f32 %v2078, %v2078
        %v2083 = vmul.f32 %v2079, %v2079
        %v2084 = vmul.f32 %v2080, %v2080
        %v2085 = vsel %vm568, %v2081, 0.0
        %2086 = vadd.xlane.f32.xlu0 %v2085
        %v2087 = vpop.xlane.xlu0 %2086
        %v2088 = vsel %vm568, %v2082, 0.0
        %2089 = vadd.xlane.f32.xlu0 %v2088
        %v2090 = vpop.xlane.xlu0 %2089
        %v2091 = vsel %vm568, %v2083, 0.0
        %2092 = vadd.xlane.f32.xlu0 %v2091
        %v2093 = vpop.xlane.xlu0 %2092
        %v2094 = vsel %vm568, %v2084, 0.0
        %2095 = vadd.xlane.f32.xlu0 %v2094
        %v2096 = vpop.xlane.xlu0 %2095
        %v2097 = vmul.f32 %v2087, %v581
        %v2098 = vmul.f32 %v2090, %v581
        %v2099 = vmul.f32 %v2093, %v581
        %v2100 = vmul.f32 %v2096, %v581
        %v2101 = vadd.f32 %v2097, 1e-06
        %v2102 = vadd.f32 %v2098, 1e-06
        %v2103 = vadd.f32 %v2099, 1e-06
        %v2104 = vadd.f32 %v2100, 1e-06
        %v2105 = vrsqrt.pop %v2101
        %v2106 = vrsqrt.pop %v2102
        %v2107 = vrsqrt.pop %v2103
        %v2108 = vrsqrt.pop %v2104
        %v2109 = vmul.f32 %v2077, %v2105
        %v2110 = vmul.f32 %v2078, %v2106
        %v2111 = vmul.f32 %v2079, %v2107
        %v2112 = vmul.f32 %v2080, %v2108
        %v2113 = vmul.f32 %v2109, %v602
        %v2114 = vmul.f32 %v2110, %v602
        %v2115 = vmul.f32 %v2111, %v602
        %v2116 = vmul.f32 %v2112, %v602
        %v2117 = vpack.c.bf16 %v2114, %v2113
        %v2118 = vpack.c.bf16 %v2116, %v2115
        %v2119 = vld [vmem:[%s9] sm:$0xf]
        %v2120 = vld [vmem:[%s9 + $0x4] sm:$0xf]
        %v2121 = vld [vmem:[%s9 + $0x8] sm:$0xf]
        %v2122 = vld [vmem:[%s9 + $0xc] sm:$0xf]
        %v2123 = vld [vmem:[%s9 + $0x10] sm:$0xf]
        %v2124 = vld [vmem:[%s9 + $0x14] sm:$0xf]
        %v2125 = vld [vmem:[%s9 + $0x18] sm:$0xf]
        %v2126 = vld [vmem:[%s9 + $0x1c] sm:$0xf]
        %v2127 = vld [vmem:[%s10] sm:$0x1]
        %v2129 = vlaneseq
        %v2130 = vshrl.u32 %v2129, 7
        %v2131 = vsub.s32 0, %v2130
        %v2132 = vrot.slane %v2127, %v2131
        %v2142 = vunpack.c.l.b16 %v2119
        %v2143 = vunpack.c.l.b16 %v2120
        %v2144 = vunpack.c.l.b16 %v2121
        %v2145 = vunpack.c.l.b16 %v2122
        %v2146 = vunpack.c.l.b16 %v2123
        %v2147 = vunpack.c.l.b16 %v2124
        %v2148 = vunpack.c.l.b16 %v2125
        %v2149 = vunpack.c.l.b16 %v2126
        %v2150 = vpack.c.b16 %v2143, %v2142
        %v2151 = vpack.c.b16 %v2145, %v2144
        %v2152 = vpack.c.b16 %v2147, %v2146
        %v2153 = vpack.c.b16 %v2149, %v2148
        %v2159 = vsel %vm568, %v2117, 0
        %v2162 = vsel %vm568, %v2118, 0
        %2164 = vmatprep.subr.bf16.mxu0 0
        %2165 = vmatpush1.bf16.msra.mxu0 %v2150
        %2166 = vmatprep.subr.bf16.mxu0 0
        %2167 = vmatpush1.bf16.msra.mxu0 %v2151
        %2168 = vmatprep.subr.bf16.mxu0 0
        %2169 = vmatpush1.bf16.msra.mxu0 %v2152
        %2170 = vmatprep.subr.bf16.mxu0 0
        %2171 = vmatpush1.bf16.msra.mxu0 %v2153
        %2172 = vmatprep.subr.bf16.mxu0 0
        %2173 = vmatpush1.bf16.msra.mxu0 0
        %2174 = vmatprep.subr.bf16.mxu0 0
        %2175 = vmatpush1.bf16.msra.mxu0 0
        %2176 = vmatprep.subr.bf16.mxu0 0
        %2177 = vmatpush1.bf16.msra.mxu0 0
        %2178 = vmatprep.subr.bf16.mxu0 0
        %2179 = vmatpush1.bf16.msra.mxu0 0
        %2180 = vmatprep.subr.bf16.mxu0 0
        %2181 = vmatpush1.bf16.msra.mxu0 0
        %2182 = vmatprep.subr.bf16.mxu0 0
        %2183 = vmatpush1.bf16.msra.mxu0 0
        %2184 = vmatprep.subr.bf16.mxu0 0
        %2185 = vmatpush1.bf16.msra.mxu0 0
        %2186 = vmatprep.subr.bf16.mxu0 0
        %2187 = vmatpush1.bf16.msra.mxu0 0
        %2188 = vmatprep.subr.bf16.mxu0 0
        %2189 = vmatpush1.bf16.msra.mxu0 0
        %2190 = vmatprep.subr.bf16.mxu0 0
        %2191 = vmatpush1.bf16.msra.mxu0 0
        %2192 = vmatprep.subr.bf16.mxu0 0
        %2193 = vmatpush1.bf16.msra.mxu0 0
        %2194 = vmatprep.subr.bf16.mxu0 0
        %2195 = vmatpush1.bf16.msra.mxu0 0
        %2196 = vmatprep.mubr.bf16.mxu0 0
        %2197 = vmatmul.mubr.bf16.gmra.mrb[0].mxu0 %v2159
        %v2198 = vpop.f32.mrb[0].mxu0
        %v2199 = vadd.f32 %v2132, %v2198
        %v2200 = vpop.f32.mrb[0].mxu0
        %v2201 = vpop.f32.mrb[0].mxu0
        %v2202 = vadd.f32 %v2132, %v2201
        %v2203 = vpop.f32.mrb[0].mxu0
        %2204 = vmatprep.mubr.bf16.mxu0 0
        %2205 = vmatmul.mubr.bf16.gmra.mrb[0].mxu0 %v2162
        %v2206 = vpop.f32.mrb[0].mxu0
        %v2207 = vadd.f32 %v2132, %v2206
        %v2208 = vpop.f32.mrb[0].mxu0
        %v2209 = vpop.f32.mrb[0].mxu0
        %v2210 = vadd.f32 %v2132, %v2209
        %v2211 = vpop.f32.mrb[0].mxu0
        %2212 = vdwg.mxu0
        %v2213 = vmax.f32 %v2199, 0.0
        %v2214 = vmax.f32 %v2202, 0.0
        %v2215 = vmax.f32 %v2207, 0.0
        %v2216 = vmax.f32 %v2210, 0.0
        %v2217 = vpack.c.bf16 %v2214, %v2213
        %v2218 = vpack.c.bf16 %v2216, %v2215
        %v2219 = vld [vmem:[%s11] sm:$0xf]
        %v2220 = vld [vmem:[%s11 + $0x4] sm:$0xf]
        %v2221 = vld [vmem:[%s11 + $0x8] sm:$0xf]
        %v2222 = vld [vmem:[%s11 + $0xc] sm:$0xf]
        %v2223 = vld [vmem:[%s11 + $0x10] sm:$0xf]
        %v2224 = vld [vmem:[%s11 + $0x14] sm:$0xf]
        %v2225 = vld [vmem:[%s11 + $0x18] sm:$0xf]
        %v2226 = vld [vmem:[%s11 + $0x1c] sm:$0xf]
        %v2227 = vld [vmem:[%s11 + $0x20] sm:$0xf]
        %v2228 = vld [vmem:[%s11 + $0x24] sm:$0xf]
        %v2229 = vld [vmem:[%s11 + $0x28] sm:$0xf]
        %v2230 = vld [vmem:[%s11 + $0x2c] sm:$0xf]
        %v2231 = vld [vmem:[%s11 + $0x30] sm:$0xf]
        %v2232 = vld [vmem:[%s11 + $0x34] sm:$0xf]
        %v2233 = vld [vmem:[%s11 + $0x38] sm:$0xf]
        %v2234 = vld [vmem:[%s11 + $0x3c] sm:$0xf]
        %v2235 = vld [vmem:[%s12] sm:$0x1]
        %v2237 = vlaneseq
        %v2238 = vshrl.u32 %v2237, 7
        %v2239 = vsub.s32 0, %v2238
        %v2240 = vrot.slane %v2235, %v2239
        %v2258 = vunpack.c.l.b16 %v2219
        %v2259 = vunpack.c.l.b16 %v2220
        %v2260 = vunpack.c.l.b16 %v2221
        %v2261 = vunpack.c.l.b16 %v2222
        %v2262 = vunpack.c.l.b16 %v2223
        %v2263 = vunpack.c.l.b16 %v2224
        %v2264 = vunpack.c.l.b16 %v2225
        %v2265 = vunpack.c.l.b16 %v2226
        %v2266 = vunpack.c.l.b16 %v2227
        %v2267 = vunpack.c.l.b16 %v2228
        %v2268 = vunpack.c.l.b16 %v2229
        %v2269 = vunpack.c.l.b16 %v2230
        %v2270 = vunpack.c.l.b16 %v2231
        %v2271 = vunpack.c.l.b16 %v2232
        %v2272 = vunpack.c.l.b16 %v2233
        %v2273 = vunpack.c.l.b16 %v2234
        %v2274 = vpack.c.b16 %v2259, %v2258
        %v2275 = vpack.c.b16 %v2261, %v2260
        %v2276 = vpack.c.b16 %v2263, %v2262
        %v2277 = vpack.c.b16 %v2265, %v2264
        %v2278 = vpack.c.b16 %v2267, %v2266
        %v2279 = vpack.c.b16 %v2269, %v2268
        %v2280 = vpack.c.b16 %v2271, %v2270
        %v2281 = vpack.c.b16 %v2273, %v2272
        %2290 = vmatprep.subr.bf16.mxu0 0
        %2291 = vmatpush1.bf16.msra.mxu0 %v2274
        %2292 = vmatprep.subr.bf16.mxu0 0
        %2293 = vmatpush1.bf16.msra.mxu0 %v2275
        %2294 = vmatprep.subr.bf16.mxu0 0
        %2295 = vmatpush1.bf16.msra.mxu0 %v2276
        %2296 = vmatprep.subr.bf16.mxu0 0
        %2297 = vmatpush1.bf16.msra.mxu0 %v2277
        %2298 = vmatprep.subr.bf16.mxu0 0
        %2299 = vmatpush1.bf16.msra.mxu0 %v2278
        %2300 = vmatprep.subr.bf16.mxu0 0
        %2301 = vmatpush1.bf16.msra.mxu0 %v2279
        %2302 = vmatprep.subr.bf16.mxu0 0
        %2303 = vmatpush1.bf16.msra.mxu0 %v2280
        %2304 = vmatprep.subr.bf16.mxu0 0
        %2305 = vmatpush1.bf16.msra.mxu0 %v2281
        %2306 = vmatprep.subr.bf16.mxu0 0
        %2307 = vmatpush1.bf16.msra.mxu0 0
        %2308 = vmatprep.subr.bf16.mxu0 0
        %2309 = vmatpush1.bf16.msra.mxu0 0
        %2310 = vmatprep.subr.bf16.mxu0 0
        %2311 = vmatpush1.bf16.msra.mxu0 0
        %2312 = vmatprep.subr.bf16.mxu0 0
        %2313 = vmatpush1.bf16.msra.mxu0 0
        %2314 = vmatprep.subr.bf16.mxu0 0
        %2315 = vmatpush1.bf16.msra.mxu0 0
        %2316 = vmatprep.subr.bf16.mxu0 0
        %2317 = vmatpush1.bf16.msra.mxu0 0
        %2318 = vmatprep.subr.bf16.mxu0 0
        %2319 = vmatpush1.bf16.msra.mxu0 0
        %2320 = vmatprep.subr.bf16.mxu0 0
        %2321 = vmatpush1.bf16.msra.mxu0 0
        %2322 = vmatprep.mubr.bf16.mxu0 0
        %2323 = vmatmul.mubr.bf16.gmra.mrb[0].mxu0 %v2217
        %v2324 = vpop.f32.mrb[0].mxu0
        %v2325 = vadd.f32 %v2240, %v2324
        %v2326 = vpop.f32.mrb[0].mxu0
        %v2327 = vpop.f32.mrb[0].mxu0
        %v2328 = vadd.f32 %v2240, %v2327
        %v2329 = vpop.f32.mrb[0].mxu0
        %2330 = vmatprep.mubr.bf16.mxu0 0
        %2331 = vmatmul.mubr.bf16.gmra.mrb[0].mxu0 %v2218
        %v2332 = vpop.f32.mrb[0].mxu0
        %v2333 = vadd.f32 %v2240, %v2332
        %v2334 = vpop.f32.mrb[0].mxu0
        %v2335 = vpop.f32.mrb[0].mxu0
        %v2336 = vadd.f32 %v2240, %v2335
        %v2337 = vpop.f32.mrb[0].mxu0
        %2338 = vdwg.mxu0
        %v2339 = vadd.f32 %v2077, %v2325
        %v2340 = vadd.f32 %v2078, %v2328
        %v2341 = vadd.f32 %v2079, %v2333
        %v2342 = vadd.f32 %v2080, %v2336
        %2343 = vst.msk [vmem:[%s529] sm:$0xff] %vm568, %v2339
        %2344 = vst.msk [vmem:[%s529 + $0x8] sm:$0xff] %vm568, %v2340
        %2345 = vst.msk [vmem:[%s529 + $0x10] sm:$0xff] %vm568, %v2341
        %2346 = vst.msk [vmem:[%s529 + $0x18] sm:$0xff] %vm568, %v2342
        %s2347 = sand.u32 %s339, 1
        %s2348 = scalar_lea.sflag [#allocation5], %s2347
        %s2349 = sand.u32 %s339, 1
        %s2350 = smul.addr %s2349, 32
        %s2351 = scalar_lea.vmem [#allocation9], %s2350
        %s2352 = sand.u32 %s367, 1
        %s2353 = scalar_lea.sflag [#allocation11], %s2352
        %s2354 = sand.u32 %s367, 1
        %s2355 = smul.addr %s2354, 64
        %s2356 = scalar_lea.vmem [#allocation10], %s2355
        // Predicated region
        $region85: #{tpu_custom_call.1} parent=71 // pred_check
          %p2357 = pneg %p349
        $region86: #{tpu_custom_call.1} parent=71 // pred_check_branch
          %2359 = sbr.rel (%p2357) target = $region88
        $region87: #{tpu_custom_call.1} parent=71 // pred_region
          %s2360 = smul.u32 4, %s39
          %s2362 = ssub.s32 512, 512
          %2363 = vsyncadd %s2348, %s2362
          %s2364 = smul.addr %s38, 4
          %s2365 = sadd.s32 %s2360, %s2364
          %s2366 = smul.addr %s2365, 128
          %s2367 = scalar_lea.hbm %s13, %s2366
          %s2368 = sshll.u32 %s2351, 4
          %s2369 = int_to_ptr.vmem [resolvable:$true] %s2368
          %2374 = dma.vmem_to_hbm [thread:$0]  %s2369, 512, %s2367, %s2348, 128, 128, 8
        $region88: #{tpu_custom_call.1} parent=71 // pred_fallthru
          _
        // Predicated region
        $region89: #{tpu_custom_call.1} parent=71 // pred_check
          %p2375 = pneg %p377
        $region90: #{tpu_custom_call.1} parent=71 // pred_check_branch
          %2377 = sbr.rel (%p2375) target = $region92
        $region91: #{tpu_custom_call.1} parent=71 // pred_region
          %s2378 = smul.u32 4, %s39
          %s2380 = ssub.s32 1024, 1024
          %2381 = vsyncadd %s2353, %s2380
          %s2382 = smul.addr %s38, 16
          %s2383 = sadd.s32 %s2378, %s2382
          %s2384 = smul.addr %s2383, 64
          %s2385 = scalar_lea.hbm %s14, %s2384
          %s2386 = sshll.u32 %s2356, 4
          %s2387 = int_to_ptr.vmem [resolvable:$true] %s2386
          %2392 = dma.vmem_to_hbm [thread:$0]  %s2387, 1024, %s2385, %s2353, 64, 64, 4
        $region92: #{tpu_custom_call.1} parent=71 // pred_fallthru
          _
      $region72: #{tpu_custom_call.1} parent=5 // pred_fallthru
        _
      %p2393 = scmp.le.s32.totalorder 2, %s29
      // Predicated region
      $region93: #{tpu_custom_call.1} parent=5 // pred_check
        %p2394 = pneg %p2393
      $region94: #{tpu_custom_call.1} parent=5 // pred_check_branch
        %2396 = sbr.rel (%p2394) target = $region96
      $region95: #{tpu_custom_call.1} parent=5 // pred_region
        %s2397 = ssub.s32 %s29, 2
        // Predicated region
        $region97: #{tpu_custom_call.1} parent=95 // pred_check
          %p2398 = pneg %p355
        $region98: #{tpu_custom_call.1} parent=95 // pred_check_branch
          %2400 = sbr.rel (%p2398) target = $region100
        $region99: #{tpu_custom_call.1} parent=95 // pred_region
          %s2401 = sand.u32 %s340, 1
          %s2402 = scalar_lea.sflag [#allocation5], %s2401
          %s2403 = sand.u32 %s340, 1
          %s2404 = smul.addr %s2403, 32
          %s2405 = scalar_lea.vmem [#allocation9], %s2404
          %2406 = dma.done %s2402, 512
        $region100: #{tpu_custom_call.1} parent=95 // pred_fallthru
          _
        // Predicated region
        $region101: #{tpu_custom_call.1} parent=95 // pred_check
          %p2407 = pneg %p383
        $region102: #{tpu_custom_call.1} parent=95 // pred_check_branch
          %2409 = sbr.rel (%p2407) target = $region104
        $region103: #{tpu_custom_call.1} parent=95 // pred_region
          %s2410 = sand.u32 %s368, 1
          %s2411 = scalar_lea.sflag [#allocation11], %s2410
          %s2412 = sand.u32 %s368, 1
          %s2413 = smul.addr %s2412, 64
          %s2414 = scalar_lea.vmem [#allocation10], %s2413
          %2415 = dma.done %s2411, 1024
        $region104: #{tpu_custom_call.1} parent=95 // pred_fallthru
          _
      $region96: #{tpu_custom_call.1} parent=5 // pred_fallthru
        _
    $region6: #{tpu_custom_call.1} parent=1 // loop_footer
      %s33 = sadd.s32 1, %s29
    $region7: #{tpu_custom_call.1} parent=1 // loop_footer_branch
      %28 = sbr.rel target = $region3
    $region8: #{tpu_custom_call.1} parent=1 // loop_exit
      _
    %2416 = vsyncpa [#allocation4], 1
    %s2417 = scalar_lea.sflag [#allocation4], 1
    %2418 = vsyncpa %s2417, 1
    %2419 = vsyncpa [#allocation7], 1
    %2420 = vsyncpa [#allocation5], 1
    %s2421 = scalar_lea.sflag [#allocation5], 1
    %2422 = vsyncpa %s2421, 1
    %2423 = vsyncpa [#allocation11], 1
    %s2424 = scalar_lea.sflag [#allocation11], 1
    %2425 = vsyncpa %s2424, 1

</llo_original>
